<compile_context>
chip_gen: v7x
topology: tpu7x:2x2x1
jax: 0.10.0
libtpu: 0.0.40
codegen_flags: <defaults>
</compile_context>

<pallas_src>
import jax
import jax.numpy as jnp
from jax import lax
from jax.experimental import pallas as pl
from jax.experimental.pallas import tpu as pltpu


VMEM_SPEC = pl.BlockSpec(memory_space=pltpu.MemorySpace.VMEM)
LANE = 128
SUBLANE = 8
# Destination gate block d takes source gate block GATE_SRC[d].
# Source order is PyTorch's (i, f, g, o); destination order is (i, f, o, g)
# so the three sigmoid gates are contiguous.
GATE_SRC = (0, 1, 3, 2)


def _round_up(v, m):
    return ((v + m - 1) // m) * m


# ----------------------------------------------------------------------------
# Fused kernel: encoder -> (cutoff-1) PathConv layers (shared LSTM) -> readout
# ----------------------------------------------------------------------------
def make_pathnn_kernel(layer_shapes, Np, Hp, Hs, G, Bp):
    """layer_shapes: tuple of (Pp, L) per PathConv layer (Pp sublane-padded)."""
    n_layers = len(layer_shapes)

    def kernel(*refs):
        (x_ref, batch_ref,
         enc_w1, enc_b1, enc_w2, enc_b2,
         w_ih, w_hh, lstm_b,
         lin1_w, lin1_b, lin2_w, lin2_b) = refs[:13]
        path_refs = refs[13:13 + 2 * n_layers]
        o_ref = refs[13 + 2 * n_layers]

        f32 = jnp.float32
        bf16 = jnp.bfloat16

        # ---- feature encoder: ReLU(ReLU(x W1 + b1) W2 + b2) ----------------
        h = jnp.dot(x_ref[...], enc_w1[...], preferred_element_type=f32) + enc_b1[...]
        h = jnp.maximum(h, 0.0)
        h = jnp.dot(h.astype(bf16), enc_w2[...], preferred_element_type=f32) + enc_b2[...]
        h = jnp.maximum(h, 0.0)                                   # [Np, Hp] f32

        W_ih = w_ih[...]                                          # [Hp, G] bf16
        W_hh = w_hh[...]                                          # [Hs, G] bf16
        bias = lstm_b[...]                                        # [1, G]  f32 (b_ih + b_hh)

        # ---- PathConv layers (one LSTM shared across layers) ----------------
        for layer, (Pp, L) in enumerate(layer_shapes):
            idx_col = path_refs[2 * layer][...]                   # [L*Pp, 1] timestep-major
            idx_last = path_refs[2 * layer + 1][...]              # [1, Pp]   paths[:, -1]
            R = L * Pp

            h_b = h.astype(bf16)

            # Per-node input projection, computed ONCE per node (bias folded
            # in once); gathered rows below get the bias exactly once.
            g_node = jnp.dot(h_b, W_ih, preferred_element_type=f32) + bias   # [Np, G]
            g_node_b = g_node.astype(bf16)

            # Batched gather of all (timestep, path) rows via one one-hot
            # matmul; timestep-major rows make the per-step slice below a
            # sublane-aligned slab.  Sentinel rows (index == Np) match no
            # node -> zero rows (their LSTM output is dropped by the scatter).
            sel_all = (lax.broadcasted_iota(jnp.int32, (R, Np), 1)
                       == idx_col).astype(bf16)                   # [R, Np]
            gx_all = jnp.dot(sel_all, g_node_b, preferred_element_type=f32)  # [R, G]

            # Scatter selector precomputed BEFORE the serial recurrence so the
            # throughput matmuls overlap with / are not fenced behind it.
            sel_scatter = (lax.broadcasted_iota(jnp.int32, (Np, Pp), 0)
                           == idx_last).astype(bf16)              # [Np, Pp]

            # Serial LSTM recurrence: only h_t @ W_hh stays on the critical
            # path, at the un-padded gate width G (128 for H=32, not 512).
            c_t = jnp.zeros((Pp, Hs), f32)
            h_t = jnp.zeros((Pp, Hs), f32)
            for t in range(L):                                    # small static L
                gx_t = gx_all[t * Pp:(t + 1) * Pp, :]
                if t == 0:
                    gates = gx_t                                  # h_0 = 0
                else:
                    gates = gx_t + jnp.dot(h_t.astype(bf16), W_hh,
                                           preferred_element_type=f32)
                # gate order (i, f, o, g): one sigmoid slab + one tanh slab
                sg = jax.nn.sigmoid(gates[:, 0:3 * Hs])
                i_g = sg[:, 0:Hs]
                f_g = sg[:, Hs:2 * Hs]
                o_g = sg[:, 2 * Hs:3 * Hs]
                g_g = jnp.tanh(gates[:, 3 * Hs:4 * Hs])
                c_t = f_g * c_t + i_g * g_g
                h_t = o_g * jnp.tanh(c_t)

            # scatter_add(h_n, paths[:, -1], dim=0, out=zeros(N, H)) as a
            # transposed one-hot matmul [Np, Pp] @ [Pp, Hs]; sentinel-padded
            # path rows (index Np) match no node -> contribute nothing.
            scattered = jnp.dot(sel_scatter, h_t.astype(bf16),
                                preferred_element_type=f32)       # [Np, Hs]
            if Hs < Hp:
                scattered = jnp.concatenate(
                    [scattered, jnp.zeros((Np, Hp - Hs), f32)], axis=1)

            # residual + Identity batch-norm + ReLU
            h = jnp.maximum(scattered + h, 0.0)                   # [Np, Hp]

        # ---- global_add_pool + prediction head ------------------------------
        pool = (lax.broadcasted_iota(jnp.int32, (Bp, Np), 0)
                == batch_ref[...]).astype(bf16)                   # [Bp, Np]
        g = jnp.dot(pool, h.astype(bf16), preferred_element_type=f32)        # [Bp, Hp]
        z = jnp.dot(g.astype(bf16), lin1_w[...], preferred_element_type=f32) + lin1_b[...]
        z = jnp.maximum(z, 0.0)
        o_ref[...] = jnp.dot(z.astype(bf16), lin2_w[...],
                             preferred_element_type=f32) + lin2_b[...]

    return kernel


# ----------------------------------------------------------------------------
# Padding helpers (exact w.r.t. unpadded semantics)
# ----------------------------------------------------------------------------
def _pad2d(w, rows, cols, dtype=jnp.float32):
    out = jnp.zeros((rows, cols), jnp.float32)
    out = out.at[:w.shape[0], :w.shape[1]].set(w.astype(jnp.float32))
    return out.astype(dtype)


def _pad_gate_mat(w, H, rows_p, Hs, G):
    """[rows, 4H] gate blocks (i,f,g,o) -> [rows_p, G] blocks (i,f,o,g), each Hs wide."""
    out = jnp.zeros((rows_p, G), jnp.float32)
    for d, s in enumerate(GATE_SRC):
        out = out.at[:w.shape[0], d * Hs:d * Hs + H].set(w[:, s * H:(s + 1) * H])
    return out.astype(jnp.bfloat16)


def _pad_gate_bias(b, H, Hs, G):
    out = jnp.zeros((1, G), jnp.float32)
    for d, s in enumerate(GATE_SRC):
        out = out.at[:, d * Hs:d * Hs + H].set(b[:, s * H:(s + 1) * H])
    return out                                                    # stays f32


def pad_params(params, input_dim, hidden_dim, n_classes):
    H = hidden_dim
    Hs = _round_up(H, SUBLANE)            # per-gate block width (sublane multiple)
    G = _round_up(4 * Hs, LANE)           # whole gate axis padded (H=32 -> G=128)
    Hp = _round_up(H, LANE)               # lane-dense node-feature width
    Dp = _round_up(input_dim, LANE)
    Cp = _round_up(n_classes, LANE)
    bf16 = jnp.bfloat16
    return {
        "enc_w1": _pad2d(params["enc_w1"], Dp, Hp, bf16),
        "enc_b1": _pad2d(params["enc_b1"], 1, Hp),
        "enc_w2": _pad2d(params["enc_w2"], Hp, Hp, bf16),
        "enc_b2": _pad2d(params["enc_b2"], 1, Hp),
        "w_ih": _pad_gate_mat(params["w_ih"], H, Hp, Hs, G),
        "w_hh": _pad_gate_mat(params["w_hh"], H, Hs, Hs, G),
        "lstm_b": _pad_gate_bias(params["b_ih"] + params["b_hh"], H, Hs, G),
        "lin1_w": _pad2d(params["lin1_w"], Hp, Hp, bf16),
        "lin1_b": _pad2d(params["lin1_b"], 1, Hp),
        "lin2_w": _pad2d(params["lin2_w"], Hp, Cp, bf16),
        "lin2_b": _pad2d(params["lin2_b"], 1, Cp),
        "dims": {"H": H, "Hs": Hs, "G": G, "Hp": Hp,
                 "Din": input_dim, "Dp": Dp, "C": n_classes, "Cp": Cp},
    }


def _vmem_limit_bytes():
    cap = 128 * 1024 * 1024
    try:
        info = pltpu.get_tpu_info()
        cap = int(getattr(info, "vmem_capacity_bytes", cap))
    except Exception:
        pass
    # Generation-aware: ~96 MiB on v5e/v6e (128 MiB), ~48 MiB on v7x (64 MiB).
    return max(32 * 1024 * 1024, (cap * 3) // 4)


# ----------------------------------------------------------------------------
# Wrapper: single fused pallas_call
# ----------------------------------------------------------------------------
def path_nn_forward(padded_params, x, paths_list, batch_idx, n_graphs):
    dims = padded_params["dims"]
    Hp, Hs, G = dims["Hp"], dims["Hs"], dims["G"]
    Dp, C, Cp = dims["Dp"], dims["C"], dims["Cp"]
    N, Din = x.shape
    Np = _round_up(N, SUBLANE)
    B = int(n_graphs)
    Bp = _round_up(B, SUBLANE)

    # Sublane-pad nodes: padded rows are never gathered, never scatter
    # targets, and their batch id (Bp) matches no pool row.
    x_p = jnp.zeros((Np, Dp), jnp.float32).at[:N, :Din].set(x).astype(jnp.bfloat16)
    batch_p = jnp.full((1, Np), Bp, jnp.int32).at[0, :N].set(
        batch_idx.reshape(-1).astype(jnp.int32))

    # Per-layer path aux tensors.  Path rows padded to a sublane multiple with
    # sentinel index Np (matches no node) -> padding is exact.
    layer_shapes = []
    path_inputs = []
    for paths in paths_list:
        P, L = paths.shape
        Pp = _round_up(P, SUBLANE)
        paths_p = jnp.full((Pp, L), Np, jnp.int32).at[:P, :].set(paths.astype(jnp.int32))
        cols = paths_p.T.reshape(L * Pp, 1)            # [L*Pp, 1] timestep-major
        last = paths_p[:, L - 1].reshape(1, Pp)        # [1, Pp]
        layer_shapes.append((Pp, L))
        path_inputs += [cols, last]

    kernel = make_pathnn_kernel(tuple(layer_shapes), Np, Hp, Hs, G, Bp)

    inputs = [x_p, batch_p,
              padded_params["enc_w1"], padded_params["enc_b1"],
              padded_params["enc_w2"], padded_params["enc_b2"],
              padded_params["w_ih"], padded_params["w_hh"], padded_params["lstm_b"],
              padded_params["lin1_w"], padded_params["lin1_b"],
              padded_params["lin2_w"], padded_params["lin2_b"]] + path_inputs

    # advisory cost estimate
    flops = 2 * Np * Dp * Hp + 2 * Np * Hp * Hp
    trans = 0
    for (Pp, L) in layer_shapes:
        R = L * Pp
        flops += 2 * Np * Hp * G              # per-node input projection
        flops += 2 * R * Np * G               # batched one-hot gather
        flops += (L - 1) * 2 * Pp * Hs * G    # recurrent h_t @ W_hh
        flops += 2 * Np * Pp * Hs             # scatter matmul
        trans += L * 5 * Pp * Hs              # sigmoid / tanh
    flops += 2 * Bp * Np * Hp + 2 * Bp * Hp * Hp + 2 * Bp * Hp * Cp
    bytes_accessed = sum(int(a.size) * a.dtype.itemsize for a in inputs) + Bp * Cp * 4

    out_p = pl.pallas_call(
        kernel,
        out_shape=jax.ShapeDtypeStruct((Bp, Cp), jnp.float32),
        in_specs=[VMEM_SPEC] * len(inputs),
        out_specs=VMEM_SPEC,
        compiler_params=pltpu.CompilerParams(vmem_limit_bytes=_vmem_limit_bytes()),
        cost_estimate=pl.CostEstimate(flops=int(flops), transcendentals=int(trans),
                                      bytes_accessed=int(bytes_accessed)),
    )(*inputs)
    return out_p[:B, :C]


# ----------------------------------------------------------------------------
# Pure-JAX reference (unpadded, f32) for a correctness spot-check
# ----------------------------------------------------------------------------
def path_nn_reference(params, x, paths_list, batch_vec, n_graphs):
    hi = lax.Precision.HIGHEST
    H = params["enc_w2"].shape[1]
    N = x.shape[0]
    h = jax.nn.relu(jnp.dot(x, params["enc_w1"], precision=hi) + params["enc_b1"])
    h = jax.nn.relu(jnp.dot(h, params["enc_w2"], precision=hi) + params["enc_b2"])
    bias = params["b_ih"] + params["b_hh"]
    for paths in paths_list:
        P, L = paths.shape
        seq = h[paths]                                            # [P, L, H]
        h_t = jnp.zeros((P, H), jnp.float32)
        c_t = jnp.zeros((P, H), jnp.float32)
        for t in range(L):
            gates = (jnp.dot(seq[:, t, :], params["w_ih"], precision=hi)
                     + jnp.dot(h_t, params["w_hh"], precision=hi) + bias)
            i_g = jax.nn.sigmoid(gates[:, 0:H])
            f_g = jax.nn.sigmoid(gates[:, H:2 * H])
            g_g = jnp.tanh(gates[:, 2 * H:3 * H])
            o_g = jax.nn.sigmoid(gates[:, 3 * H:4 * H])
            c_t = f_g * c_t + i_g * g_g
            h_t = o_g * jnp.tanh(c_t)
        scattered = jnp.zeros((N, H), jnp.float32).at[paths[:, -1]].add(h_t)
        h = jax.nn.relu(scattered + h)
    g = jnp.zeros((n_graphs, H), jnp.float32).at[batch_vec].add(h)
    z = jax.nn.relu(jnp.dot(g, params["lin1_w"], precision=hi) + params["lin1_b"])
    return jnp.dot(z, params["lin2_w"], precision=hi) + params["lin2_b"]


# ----------------------------------------------------------------------------
# Deterministic parameter init (PyTorch-style uniform(-1/sqrt(fan_in), ...))
# ----------------------------------------------------------------------------
def init_params(key, input_dim, hidden_dim, n_classes):
    keys = jax.random.split(key, 12)

    def u(k, shape, fan_in):
        bound = 1.0 / float(fan_in) ** 0.5
        return jax.random.uniform(k, shape, jnp.float32, -bound, bound)

    H = hidden_dim
    return {
        # feature encoder (weights stored as [in, out])
        "enc_w1": u(keys[0], (input_dim, H), input_dim),
        "enc_b1": u(keys[1], (1, H), input_dim),
        "enc_w2": u(keys[2], (H, H), H),
        "enc_b2": u(keys[3], (1, H), H),
        # shared LSTM (torch [4H, H] stored transposed as [H, 4H], gates i,f,g,o)
        "w_ih": u(keys[4], (H, 4 * H), H),
        "w_hh": u(keys[5], (H, 4 * H), H),
        "b_ih": u(keys[6], (1, 4 * H), H),
        "b_hh": u(keys[7], (1, 4 * H), H),
        # prediction head
        "lin1_w": u(keys[8], (H, H), H),
        "lin1_b": u(keys[9], (1, H), H),
        "lin2_w": u(keys[10], (H, n_classes), H),
        "lin2_b": u(keys[11], (1, n_classes), H),
    }


if __name__ == "__main__":
    # small synthetic "graph batch" consistent with PathNN's data interface
    N = 12          # total nodes
    INPUT_DIM = 7
    HIDDEN = 32
    CUTOFF = 3      # -> path tables of length 2 and 3 (cutoff - 1 conv layers)
    N_CLASSES = 3
    B = 2           # graphs in the batch

    key = jax.random.PRNGKey(0)
    k_par, k_x, k_p2, k_p3 = jax.random.split(key, 4)

    params = init_params(k_par, INPUT_DIM, HIDDEN, N_CLASSES)
    padded = pad_params(params, INPUT_DIM, HIDDEN, N_CLASSES)

    x = jax.random.normal(k_x, (N, INPUT_DIM), jnp.float32)          # data.x
    path_2 = jax.random.randint(k_p2, (20, 2), 0, N, jnp.int32)      # data.path_2
    path_3 = jax.random.randint(k_p3, (24, 3), 0, N, jnp.int32)      # data.path_3
    batch_idx = jnp.concatenate(
        [jnp.zeros((6,), jnp.int32), jnp.ones((N - 6,), jnp.int32)])  # data.batch

    # Wrapper-side padding / transposes are fused into the same jit as the
    # pallas_call (review item: no separate per-forward HBM-resident copies).
    fwd = jax.jit(lambda xx, p2, p3, bb: path_nn_forward(padded, xx, [p2, p3], bb, B))
    out = jax.block_until_ready(fwd(x, path_2, path_3, batch_idx))
    assert out.shape == (B, N_CLASSES)

    # sanity check against a pure-JAX f32 reference (generous tolerance:
    # kernel matmuls use bf16 operands with f32 accumulation)
    ref = path_nn_reference(params, x, [path_2, path_3], batch_idx, B)
    max_err = float(jnp.max(jnp.abs(out - ref)))
    tol = 5e-2 * (1.0 + float(jnp.max(jnp.abs(ref))))
    assert max_err < tol, f"mismatch vs reference: {max_err} (tol {tol})"

    print("KERNEL_OK")
</pallas_src>

<mosaic_0001>
module attributes {stable_mosaic.version = 11 : i64} {
  func.func @kernel(%arg0: memref<16x128xbf16, #tpu.memory_space<vmem>>, %arg1: memref<1x16xi32, #tpu.memory_space<vmem>>, %arg2: memref<128x128xbf16, #tpu.memory_space<vmem>>, %arg3: memref<1x128xf32, #tpu.memory_space<vmem>>, %arg4: memref<128x128xbf16, #tpu.memory_space<vmem>>, %arg5: memref<1x128xf32, #tpu.memory_space<vmem>>, %arg6: memref<128x128xbf16, #tpu.memory_space<vmem>>, %arg7: memref<32x128xbf16, #tpu.memory_space<vmem>>, %arg8: memref<1x128xf32, #tpu.memory_space<vmem>>, %arg9: memref<128x128xbf16, #tpu.memory_space<vmem>>, %arg10: memref<1x128xf32, #tpu.memory_space<vmem>>, %arg11: memref<128x128xbf16, #tpu.memory_space<vmem>>, %arg12: memref<1x128xf32, #tpu.memory_space<vmem>>, %arg13: memref<48x1xi32, #tpu.memory_space<vmem>>, %arg14: memref<1x24xi32, #tpu.memory_space<vmem>>, %arg15: memref<72x1xi32, #tpu.memory_space<vmem>>, %arg16: memref<1x24xi32, #tpu.memory_space<vmem>>, %arg17: memref<8x128xf32, #tpu.memory_space<vmem>>) attributes {dimension_semantics = [], scalar_prefetch = 0 : i64, scratch_operands = 0 : i64, tpu.core_type = #tpu.core_type<tc>} {
    %c0 = arith.constant 0 : index
    %c0_0 = arith.constant 0 : index
    %0 = vector.load %arg0[%c0, %c0_0] : memref<16x128xbf16, #tpu.memory_space<vmem>>, vector<16x128xbf16>
    %c0_1 = arith.constant 0 : index
    %c0_2 = arith.constant 0 : index
    %1 = vector.load %arg2[%c0_1, %c0_2] : memref<128x128xbf16, #tpu.memory_space<vmem>>, vector<128x128xbf16>
    %cst = arith.constant dense<0.000000e+00> : vector<16x128xf32>
    %2 = tpu.matmul %0, %1, %cst {dimension_numbers = #tpu.dot_dimension_numbers<[1], [0], [0], [1], [0, 0, 1, 1], [], []>} : vector<16x128xbf16>, vector<128x128xbf16>, vector<16x128xf32> -> vector<16x128xf32>
    %c0_3 = arith.constant 0 : index
    %c0_4 = arith.constant 0 : index
    %3 = vector.load %arg3[%c0_3, %c0_4] : memref<1x128xf32, #tpu.memory_space<vmem>>, vector<1x128xf32>
    %4 = vector.broadcast %3 : vector<1x128xf32> to vector<16x128xf32>
    %5 = arith.addf %2, %4 : vector<16x128xf32>
    %cst_5 = arith.constant 0.000000e+00 : f32
    %6 = vector.broadcast %cst_5 : f32 to vector<16x128xf32>
    %7 = arith.maximumf %5, %6 : vector<16x128xf32>
    %8 = arith.truncf %7 : vector<16x128xf32> to vector<16x128xbf16>
    %c0_6 = arith.constant 0 : index
    %c0_7 = arith.constant 0 : index
    %9 = vector.load %arg4[%c0_6, %c0_7] : memref<128x128xbf16, #tpu.memory_space<vmem>>, vector<128x128xbf16>
    %cst_8 = arith.constant dense<0.000000e+00> : vector<16x128xf32>
    %10 = tpu.matmul %8, %9, %cst_8 {dimension_numbers = #tpu.dot_dimension_numbers<[1], [0], [0], [1], [0, 0, 1, 1], [], []>} : vector<16x128xbf16>, vector<128x128xbf16>, vector<16x128xf32> -> vector<16x128xf32>
    %c0_9 = arith.constant 0 : index
    %c0_10 = arith.constant 0 : index
    %11 = vector.load %arg5[%c0_9, %c0_10] : memref<1x128xf32, #tpu.memory_space<vmem>>, vector<1x128xf32>
    %12 = vector.broadcast %11 : vector<1x128xf32> to vector<16x128xf32>
    %13 = arith.addf %10, %12 : vector<16x128xf32>
    %cst_11 = arith.constant 0.000000e+00 : f32
    %14 = vector.broadcast %cst_11 : f32 to vector<16x128xf32>
    %15 = arith.maximumf %13, %14 : vector<16x128xf32>
    %c0_12 = arith.constant 0 : index
    %c0_13 = arith.constant 0 : index
    %16 = vector.load %arg6[%c0_12, %c0_13] : memref<128x128xbf16, #tpu.memory_space<vmem>>, vector<128x128xbf16>
    %c0_14 = arith.constant 0 : index
    %c0_15 = arith.constant 0 : index
    %17 = vector.load %arg7[%c0_14, %c0_15] : memref<32x128xbf16, #tpu.memory_space<vmem>>, vector<32x128xbf16>
    %c0_16 = arith.constant 0 : index
    %c0_17 = arith.constant 0 : index
    %18 = vector.load %arg8[%c0_16, %c0_17] : memref<1x128xf32, #tpu.memory_space<vmem>>, vector<1x128xf32>
    %c0_18 = arith.constant 0 : index
    %c0_19 = arith.constant 0 : index
    %19 = vector.load %arg13[%c0_18, %c0_19] : memref<48x1xi32, #tpu.memory_space<vmem>>, vector<48x1xi32>
    %c0_20 = arith.constant 0 : index
    %c0_21 = arith.constant 0 : index
    %20 = vector.load %arg14[%c0_20, %c0_21] : memref<1x24xi32, #tpu.memory_space<vmem>>, vector<1x24xi32>
    %21 = arith.truncf %15 : vector<16x128xf32> to vector<16x128xbf16>
    %cst_22 = arith.constant dense<0.000000e+00> : vector<16x128xf32>
    %22 = tpu.matmul %21, %16, %cst_22 {dimension_numbers = #tpu.dot_dimension_numbers<[1], [0], [0], [1], [0, 0, 1, 1], [], []>} : vector<16x128xbf16>, vector<128x128xbf16>, vector<16x128xf32> -> vector<16x128xf32>
    %23 = vector.broadcast %18 : vector<1x128xf32> to vector<16x128xf32>
    %24 = arith.addf %22, %23 : vector<16x128xf32>
    %25 = arith.truncf %24 : vector<16x128xf32> to vector<16x128xbf16>
    %26 = tpu.iota {dimensions = array<i32: 1>} : vector<48x16xi32>
    %27 = vector.broadcast %19 : vector<48x1xi32> to vector<48x16xi32>
    %28 = arith.cmpi eq, %26, %27 : vector<48x16xi32>
    %29 = arith.extui %28 : vector<48x16xi1> to vector<48x16xi32>
    %30 = arith.sitofp %29 : vector<48x16xi32> to vector<48x16xf32>
    %31 = arith.truncf %30 : vector<48x16xf32> to vector<48x16xbf16>
    %cst_23 = arith.constant dense<0.000000e+00> : vector<48x128xf32>
    %32 = tpu.matmul %31, %25, %cst_23 {dimension_numbers = #tpu.dot_dimension_numbers<[1], [0], [0], [1], [0, 0, 1, 1], [], []>} : vector<48x16xbf16>, vector<16x128xbf16>, vector<48x128xf32> -> vector<48x128xf32>
    %33 = tpu.iota {dimensions = array<i32: 0>} : vector<16x24xi32>
    %34 = vector.broadcast %20 : vector<1x24xi32> to vector<16x24xi32>
    %35 = arith.cmpi eq, %33, %34 : vector<16x24xi32>
    %36 = arith.extui %35 : vector<16x24xi1> to vector<16x24xi32>
    %37 = arith.sitofp %36 : vector<16x24xi32> to vector<16x24xf32>
    %38 = arith.truncf %37 : vector<16x24xf32> to vector<16x24xbf16>
    %cst_24 = arith.constant 0.000000e+00 : f32
    %39 = vector.broadcast %cst_24 : f32 to vector<24x32xf32>
    %40 = vector.extract_strided_slice %32 {offsets = [0, 0], sizes = [24, 128], strides = [1, 1]} : vector<48x128xf32> to vector<24x128xf32>
    %41 = vector.extract_strided_slice %40 {offsets = [0, 0], sizes = [24, 96], strides = [1, 1]} : vector<24x128xf32> to vector<24x96xf32>
    %42 = arith.negf %41 : vector<24x96xf32>
    %43 = math.exp %42 : vector<24x96xf32>
    %cst_25 = arith.constant 1.000000e+00 : f32
    %44 = vector.broadcast %cst_25 : f32 to vector<24x96xf32>
    %45 = arith.addf %44, %43 : vector<24x96xf32>
    %46 = arith.divf %44, %45 : vector<24x96xf32>
    %47 = vector.extract_strided_slice %46 {offsets = [0, 0], sizes = [24, 32], strides = [1, 1]} : vector<24x96xf32> to vector<24x32xf32>
    %48 = vector.extract_strided_slice %46 {offsets = [0, 32], sizes = [24, 32], strides = [1, 1]} : vector<24x96xf32> to vector<24x32xf32>
    %49 = vector.extract_strided_slice %46 {offsets = [0, 64], sizes = [24, 32], strides = [1, 1]} : vector<24x96xf32> to vector<24x32xf32>
    %50 = vector.extract_strided_slice %40 {offsets = [0, 96], sizes = [24, 32], strides = [1, 1]} : vector<24x128xf32> to vector<24x32xf32>
    %51 = math.tanh %50 : vector<24x32xf32>
    %52 = arith.mulf %48, %39 : vector<24x32xf32>
    %53 = arith.mulf %47, %51 : vector<24x32xf32>
    %54 = arith.addf %52, %53 : vector<24x32xf32>
    %55 = math.tanh %54 : vector<24x32xf32>
    %56 = arith.mulf %49, %55 : vector<24x32xf32>
    %57 = vector.extract_strided_slice %32 {offsets = [24, 0], sizes = [24, 128], strides = [1, 1]} : vector<48x128xf32> to vector<24x128xf32>
    %58 = arith.truncf %56 : vector<24x32xf32> to vector<24x32xbf16>
    %cst_26 = arith.constant dense<0.000000e+00> : vector<24x128xf32>
    %59 = tpu.matmul %58, %17, %cst_26 {dimension_numbers = #tpu.dot_dimension_numbers<[1], [0], [0], [1], [0, 0, 1, 1], [], []>} : vector<24x32xbf16>, vector<32x128xbf16>, vector<24x128xf32> -> vector<24x128xf32>
    %60 = arith.addf %57, %59 : vector<24x128xf32>
    %61 = vector.extract_strided_slice %60 {offsets = [0, 0], sizes = [24, 96], strides = [1, 1]} : vector<24x128xf32> to vector<24x96xf32>
    %62 = arith.negf %61 : vector<24x96xf32>
    %63 = math.exp %62 : vector<24x96xf32>
    %cst_27 = arith.constant 1.000000e+00 : f32
    %64 = vector.broadcast %cst_27 : f32 to vector<24x96xf32>
    %65 = arith.addf %64, %63 : vector<24x96xf32>
    %66 = arith.divf %64, %65 : vector<24x96xf32>
    %67 = vector.extract_strided_slice %66 {offsets = [0, 0], sizes = [24, 32], strides = [1, 1]} : vector<24x96xf32> to vector<24x32xf32>
    %68 = vector.extract_strided_slice %66 {offsets = [0, 32], sizes = [24, 32], strides = [1, 1]} : vector<24x96xf32> to vector<24x32xf32>
    %69 = vector.extract_strided_slice %66 {offsets = [0, 64], sizes = [24, 32], strides = [1, 1]} : vector<24x96xf32> to vector<24x32xf32>
    %70 = vector.extract_strided_slice %60 {offsets = [0, 96], sizes = [24, 32], strides = [1, 1]} : vector<24x128xf32> to vector<24x32xf32>
    %71 = math.tanh %70 : vector<24x32xf32>
    %72 = arith.mulf %68, %54 : vector<24x32xf32>
    %73 = arith.mulf %67, %71 : vector<24x32xf32>
    %74 = arith.addf %72, %73 : vector<24x32xf32>
    %75 = math.tanh %74 : vector<24x32xf32>
    %76 = arith.mulf %69, %75 : vector<24x32xf32>
    %77 = arith.truncf %76 : vector<24x32xf32> to vector<24x32xbf16>
    %cst_28 = arith.constant dense<0.000000e+00> : vector<16x32xf32>
    %78 = tpu.matmul %38, %77, %cst_28 {dimension_numbers = #tpu.dot_dimension_numbers<[1], [0], [0], [1], [0, 0, 1, 1], [], []>} : vector<16x24xbf16>, vector<24x32xbf16>, vector<16x32xf32> -> vector<16x32xf32>
    %cst_29 = arith.constant 0.000000e+00 : f32
    %79 = vector.broadcast %cst_29 : f32 to vector<16x96xf32>
    %80 = tpu.concatenate %78, %79 in 1 : vector<16x32xf32>, vector<16x96xf32> -> vector<16x128xf32>
    %81 = arith.addf %80, %15 : vector<16x128xf32>
    %cst_30 = arith.constant 0.000000e+00 : f32
    %82 = vector.broadcast %cst_30 : f32 to vector<16x128xf32>
    %83 = arith.maximumf %81, %82 : vector<16x128xf32>
    %c0_31 = arith.constant 0 : index
    %c0_32 = arith.constant 0 : index
    %84 = vector.load %arg15[%c0_31, %c0_32] : memref<72x1xi32, #tpu.memory_space<vmem>>, vector<72x1xi32>
    %c0_33 = arith.constant 0 : index
    %c0_34 = arith.constant 0 : index
    %85 = vector.load %arg16[%c0_33, %c0_34] : memref<1x24xi32, #tpu.memory_space<vmem>>, vector<1x24xi32>
    %86 = arith.truncf %83 : vector<16x128xf32> to vector<16x128xbf16>
    %cst_35 = arith.constant dense<0.000000e+00> : vector<16x128xf32>
    %87 = tpu.matmul %86, %16, %cst_35 {dimension_numbers = #tpu.dot_dimension_numbers<[1], [0], [0], [1], [0, 0, 1, 1], [], []>} : vector<16x128xbf16>, vector<128x128xbf16>, vector<16x128xf32> -> vector<16x128xf32>
    %88 = vector.broadcast %18 : vector<1x128xf32> to vector<16x128xf32>
    %89 = arith.addf %87, %88 : vector<16x128xf32>
    %90 = arith.truncf %89 : vector<16x128xf32> to vector<16x128xbf16>
    %91 = tpu.iota {dimensions = array<i32: 1>} : vector<72x16xi32>
    %92 = vector.broadcast %84 : vector<72x1xi32> to vector<72x16xi32>
    %93 = arith.cmpi eq, %91, %92 : vector<72x16xi32>
    %94 = arith.extui %93 : vector<72x16xi1> to vector<72x16xi32>
    %95 = arith.sitofp %94 : vector<72x16xi32> to vector<72x16xf32>
    %96 = arith.truncf %95 : vector<72x16xf32> to vector<72x16xbf16>
    %cst_36 = arith.constant dense<0.000000e+00> : vector<72x128xf32>
    %97 = tpu.matmul %96, %90, %cst_36 {dimension_numbers = #tpu.dot_dimension_numbers<[1], [0], [0], [1], [0, 0, 1, 1], [], []>} : vector<72x16xbf16>, vector<16x128xbf16>, vector<72x128xf32> -> vector<72x128xf32>
    %98 = tpu.iota {dimensions = array<i32: 0>} : vector<16x24xi32>
    %99 = vector.broadcast %85 : vector<1x24xi32> to vector<16x24xi32>
    %100 = arith.cmpi eq, %98, %99 : vector<16x24xi32>
    %101 = arith.extui %100 : vector<16x24xi1> to vector<16x24xi32>
    %102 = arith.sitofp %101 : vector<16x24xi32> to vector<16x24xf32>
    %103 = arith.truncf %102 : vector<16x24xf32> to vector<16x24xbf16>
    %cst_37 = arith.constant 0.000000e+00 : f32
    %104 = vector.broadcast %cst_37 : f32 to vector<24x32xf32>
    %105 = vector.extract_strided_slice %97 {offsets = [0, 0], sizes = [24, 128], strides = [1, 1]} : vector<72x128xf32> to vector<24x128xf32>
    %106 = vector.extract_strided_slice %105 {offsets = [0, 0], sizes = [24, 96], strides = [1, 1]} : vector<24x128xf32> to vector<24x96xf32>
    %107 = arith.negf %106 : vector<24x96xf32>
    %108 = math.exp %107 : vector<24x96xf32>
    %cst_38 = arith.constant 1.000000e+00 : f32
    %109 = vector.broadcast %cst_38 : f32 to vector<24x96xf32>
    %110 = arith.addf %109, %108 : vector<24x96xf32>
    %111 = arith.divf %109, %110 : vector<24x96xf32>
    %112 = vector.extract_strided_slice %111 {offsets = [0, 0], sizes = [24, 32], strides = [1, 1]} : vector<24x96xf32> to vector<24x32xf32>
    %113 = vector.extract_strided_slice %111 {offsets = [0, 32], sizes = [24, 32], strides = [1, 1]} : vector<24x96xf32> to vector<24x32xf32>
    %114 = vector.extract_strided_slice %111 {offsets = [0, 64], sizes = [24, 32], strides = [1, 1]} : vector<24x96xf32> to vector<24x32xf32>
    %115 = vector.extract_strided_slice %105 {offsets = [0, 96], sizes = [24, 32], strides = [1, 1]} : vector<24x128xf32> to vector<24x32xf32>
    %116 = math.tanh %115 : vector<24x32xf32>
    %117 = arith.mulf %113, %104 : vector<24x32xf32>
    %118 = arith.mulf %112, %116 : vector<24x32xf32>
    %119 = arith.addf %117, %118 : vector<24x32xf32>
    %120 = math.tanh %119 : vector<24x32xf32>
    %121 = arith.mulf %114, %120 : vector<24x32xf32>
    %122 = vector.extract_strided_slice %97 {offsets = [24, 0], sizes = [24, 128], strides = [1, 1]} : vector<72x128xf32> to vector<24x128xf32>
    %123 = arith.truncf %121 : vector<24x32xf32> to vector<24x32xbf16>
    %cst_39 = arith.constant dense<0.000000e+00> : vector<24x128xf32>
    %124 = tpu.matmul %123, %17, %cst_39 {dimension_numbers = #tpu.dot_dimension_numbers<[1], [0], [0], [1], [0, 0, 1, 1], [], []>} : vector<24x32xbf16>, vector<32x128xbf16>, vector<24x128xf32> -> vector<24x128xf32>
    %125 = arith.addf %122, %124 : vector<24x128xf32>
    %126 = vector.extract_strided_slice %125 {offsets = [0, 0], sizes = [24, 96], strides = [1, 1]} : vector<24x128xf32> to vector<24x96xf32>
    %127 = arith.negf %126 : vector<24x96xf32>
    %128 = math.exp %127 : vector<24x96xf32>
    %cst_40 = arith.constant 1.000000e+00 : f32
    %129 = vector.broadcast %cst_40 : f32 to vector<24x96xf32>
    %130 = arith.addf %129, %128 : vector<24x96xf32>
    %131 = arith.divf %129, %130 : vector<24x96xf32>
    %132 = vector.extract_strided_slice %131 {offsets = [0, 0], sizes = [24, 32], strides = [1, 1]} : vector<24x96xf32> to vector<24x32xf32>
    %133 = vector.extract_strided_slice %131 {offsets = [0, 32], sizes = [24, 32], strides = [1, 1]} : vector<24x96xf32> to vector<24x32xf32>
    %134 = vector.extract_strided_slice %131 {offsets = [0, 64], sizes = [24, 32], strides = [1, 1]} : vector<24x96xf32> to vector<24x32xf32>
    %135 = vector.extract_strided_slice %125 {offsets = [0, 96], sizes = [24, 32], strides = [1, 1]} : vector<24x128xf32> to vector<24x32xf32>
    %136 = math.tanh %135 : vector<24x32xf32>
    %137 = arith.mulf %133, %119 : vector<24x32xf32>
    %138 = arith.mulf %132, %136 : vector<24x32xf32>
    %139 = arith.addf %137, %138 : vector<24x32xf32>
    %140 = math.tanh %139 : vector<24x32xf32>
    %141 = arith.mulf %134, %140 : vector<24x32xf32>
    %142 = vector.extract_strided_slice %97 {offsets = [48, 0], sizes = [24, 128], strides = [1, 1]} : vector<72x128xf32> to vector<24x128xf32>
    %143 = arith.truncf %141 : vector<24x32xf32> to vector<24x32xbf16>
    %cst_41 = arith.constant dense<0.000000e+00> : vector<24x128xf32>
    %144 = tpu.matmul %143, %17, %cst_41 {dimension_numbers = #tpu.dot_dimension_numbers<[1], [0], [0], [1], [0, 0, 1, 1], [], []>} : vector<24x32xbf16>, vector<32x128xbf16>, vector<24x128xf32> -> vector<24x128xf32>
    %145 = arith.addf %142, %144 : vector<24x128xf32>
    %146 = vector.extract_strided_slice %145 {offsets = [0, 0], sizes = [24, 96], strides = [1, 1]} : vector<24x128xf32> to vector<24x96xf32>
    %147 = arith.negf %146 : vector<24x96xf32>
    %148 = math.exp %147 : vector<24x96xf32>
    %cst_42 = arith.constant 1.000000e+00 : f32
    %149 = vector.broadcast %cst_42 : f32 to vector<24x96xf32>
    %150 = arith.addf %149, %148 : vector<24x96xf32>
    %151 = arith.divf %149, %150 : vector<24x96xf32>
    %152 = vector.extract_strided_slice %151 {offsets = [0, 0], sizes = [24, 32], strides = [1, 1]} : vector<24x96xf32> to vector<24x32xf32>
    %153 = vector.extract_strided_slice %151 {offsets = [0, 32], sizes = [24, 32], strides = [1, 1]} : vector<24x96xf32> to vector<24x32xf32>
    %154 = vector.extract_strided_slice %151 {offsets = [0, 64], sizes = [24, 32], strides = [1, 1]} : vector<24x96xf32> to vector<24x32xf32>
    %155 = vector.extract_strided_slice %145 {offsets = [0, 96], sizes = [24, 32], strides = [1, 1]} : vector<24x128xf32> to vector<24x32xf32>
    %156 = math.tanh %155 : vector<24x32xf32>
    %157 = arith.mulf %153, %139 : vector<24x32xf32>
    %158 = arith.mulf %152, %156 : vector<24x32xf32>
    %159 = arith.addf %157, %158 : vector<24x32xf32>
    %160 = math.tanh %159 : vector<24x32xf32>
    %161 = arith.mulf %154, %160 : vector<24x32xf32>
    %162 = arith.truncf %161 : vector<24x32xf32> to vector<24x32xbf16>
    %cst_43 = arith.constant dense<0.000000e+00> : vector<16x32xf32>
    %163 = tpu.matmul %103, %162, %cst_43 {dimension_numbers = #tpu.dot_dimension_numbers<[1], [0], [0], [1], [0, 0, 1, 1], [], []>} : vector<16x24xbf16>, vector<24x32xbf16>, vector<16x32xf32> -> vector<16x32xf32>
    %cst_44 = arith.constant 0.000000e+00 : f32
    %164 = vector.broadcast %cst_44 : f32 to vector<16x96xf32>
    %165 = tpu.concatenate %163, %164 in 1 : vector<16x32xf32>, vector<16x96xf32> -> vector<16x128xf32>
    %166 = arith.addf %165, %83 : vector<16x128xf32>
    %cst_45 = arith.constant 0.000000e+00 : f32
    %167 = vector.broadcast %cst_45 : f32 to vector<16x128xf32>
    %168 = arith.maximumf %166, %167 : vector<16x128xf32>
    %169 = tpu.iota {dimensions = array<i32: 0>} : vector<8x16xi32>
    %c0_46 = arith.constant 0 : index
    %c0_47 = arith.constant 0 : index
    %170 = vector.load %arg1[%c0_46, %c0_47] : memref<1x16xi32, #tpu.memory_space<vmem>>, vector<1x16xi32>
    %171 = vector.broadcast %170 : vector<1x16xi32> to vector<8x16xi32>
    %172 = arith.cmpi eq, %169, %171 : vector<8x16xi32>
    %173 = arith.extui %172 : vector<8x16xi1> to vector<8x16xi32>
    %174 = arith.sitofp %173 : vector<8x16xi32> to vector<8x16xf32>
    %175 = arith.truncf %174 : vector<8x16xf32> to vector<8x16xbf16>
    %176 = arith.truncf %168 : vector<16x128xf32> to vector<16x128xbf16>
    %cst_48 = arith.constant dense<0.000000e+00> : vector<8x128xf32>
    %177 = tpu.matmul %175, %176, %cst_48 {dimension_numbers = #tpu.dot_dimension_numbers<[1], [0], [0], [1], [0, 0, 1, 1], [], []>} : vector<8x16xbf16>, vector<16x128xbf16>, vector<8x128xf32> -> vector<8x128xf32>
    %178 = arith.truncf %177 : vector<8x128xf32> to vector<8x128xbf16>
    %c0_49 = arith.constant 0 : index
    %c0_50 = arith.constant 0 : index
    %179 = vector.load %arg9[%c0_49, %c0_50] : memref<128x128xbf16, #tpu.memory_space<vmem>>, vector<128x128xbf16>
    %cst_51 = arith.constant dense<0.000000e+00> : vector<8x128xf32>
    %180 = tpu.matmul %178, %179, %cst_51 {dimension_numbers = #tpu.dot_dimension_numbers<[1], [0], [0], [1], [0, 0, 1, 1], [], []>} : vector<8x128xbf16>, vector<128x128xbf16>, vector<8x128xf32> -> vector<8x128xf32>
    %c0_52 = arith.constant 0 : index
    %c0_53 = arith.constant 0 : index
    %181 = vector.load %arg10[%c0_52, %c0_53] : memref<1x128xf32, #tpu.memory_space<vmem>>, vector<1x128xf32>
    %182 = vector.broadcast %181 : vector<1x128xf32> to vector<8x128xf32>
    %183 = arith.addf %180, %182 : vector<8x128xf32>
    %cst_54 = arith.constant 0.000000e+00 : f32
    %184 = vector.broadcast %cst_54 : f32 to vector<8x128xf32>
    %185 = arith.maximumf %183, %184 : vector<8x128xf32>
    %186 = arith.truncf %185 : vector<8x128xf32> to vector<8x128xbf16>
    %c0_55 = arith.constant 0 : index
    %c0_56 = arith.constant 0 : index
    %187 = vector.load %arg11[%c0_55, %c0_56] : memref<128x128xbf16, #tpu.memory_space<vmem>>, vector<128x128xbf16>
    %cst_57 = arith.constant dense<0.000000e+00> : vector<8x128xf32>
    %188 = tpu.matmul %186, %187, %cst_57 {dimension_numbers = #tpu.dot_dimension_numbers<[1], [0], [0], [1], [0, 0, 1, 1], [], []>} : vector<8x128xbf16>, vector<128x128xbf16>, vector<8x128xf32> -> vector<8x128xf32>
    %c0_58 = arith.constant 0 : index
    %c0_59 = arith.constant 0 : index
    %189 = vector.load %arg12[%c0_58, %c0_59] : memref<1x128xf32, #tpu.memory_space<vmem>>, vector<1x128xf32>
    %190 = vector.broadcast %189 : vector<1x128xf32> to vector<8x128xf32>
    %191 = arith.addf %188, %190 : vector<8x128xf32>
    %c0_60 = arith.constant 0 : index
    %c0_61 = arith.constant 0 : index
    %192 = vector.load %arg17[%c0_60, %c0_61] : memref<8x128xf32, #tpu.memory_space<vmem>>, vector<8x128xf32>
    tpu.vector_store %arg17[%c0_60, %c0_61], %191 {strides = array<i32>} : memref<8x128xf32, #tpu.memory_space<vmem>>, vector<8x128xf32>,
    return
  }
}

</mosaic_0001>

<llo_original>
// kernel: _lambda_.1
$region0: #{_lambda_.1}
  #allocation0 [shape = 'u32[]', space=smem, size = 0x4, offset = 0x4, fixed_abs, tag = 'smem constant byte address 0x4 - core index']
  #allocation1 [shape = 'u32[144,128]{1,0:T(1,128)}', space=vmem, size = 0x12000, scoped, tag = 'internal scratch']
  %s0 = inlined_call_operand.hbm [shape: bf16[16,128], index: 0, kind: input, shape index: {}]
  %s1 = inlined_call_operand.hbm [shape: s32[1,16], index: 1, kind: input, shape index: {}]
  %s2 = inlined_call_operand.hbm [shape: bf16[128,128], index: 2, kind: input, shape index: {}]
  %s3 = inlined_call_operand.hbm [shape: f32[1,128], index: 3, kind: input, shape index: {}]
  %s4 = inlined_call_operand.hbm [shape: bf16[128,128], index: 4, kind: input, shape index: {}]
  %s5 = inlined_call_operand.hbm [shape: f32[1,128], index: 5, kind: input, shape index: {}]
  %s6 = inlined_call_operand.hbm [shape: bf16[128,128], index: 6, kind: input, shape index: {}]
  %s7 = inlined_call_operand.hbm [shape: bf16[32,128], index: 7, kind: input, shape index: {}]
  %s8 = inlined_call_operand.hbm [shape: f32[1,128], index: 8, kind: input, shape index: {}]
  %s9 = inlined_call_operand.hbm [shape: bf16[128,128], index: 9, kind: input, shape index: {}]
  %s10 = inlined_call_operand.hbm [shape: f32[1,128], index: 10, kind: input, shape index: {}]
  %s11 = inlined_call_operand.hbm [shape: bf16[128,128], index: 11, kind: input, shape index: {}]
  %s12 = inlined_call_operand.hbm [shape: f32[1,128], index: 12, kind: input, shape index: {}]
  %s13 = inlined_call_operand.hbm [shape: s32[48,1], index: 13, kind: input, shape index: {}]
  %s14 = inlined_call_operand.hbm [shape: s32[1,24], index: 14, kind: input, shape index: {}]
  %s15 = inlined_call_operand.hbm [shape: s32[72,1], index: 15, kind: input, shape index: {}]
  %s16 = inlined_call_operand.hbm [shape: s32[1,24], index: 16, kind: input, shape index: {}]
  %s17 = inlined_call_operand.hbm [shape: f32[8,128], index: 17, kind: output, shape index: {}]
  %s18 = sld [smem:[#allocation0]]
  $region146: #{_lambda_.1} parent=0
    _
  %s20 = ssub.s32 1, %s18
  %s21 = scalar_select 0, %s20, %s18
  $region1: #{_lambda_.1} parent=0
    #allocation2 [shape = 'u8[4096]{0}', space=vmem, size = 0x1000, scoped, tag = 'input window, operand 0, single buffered']
    #allocation3 [shape = 's32[1]{0}', space=sflag, size = 0x4, scoped, tag = 'scoped memory for _lambda_.1']
    #allocation4 [shape = 's32[1]{0}', space=sflag, size = 0x4, scoped, tag = 'scoped memory for _lambda_.1']
    #allocation5 [shape = 'u8[512]{0}', space=vmem, size = 0x400, scoped, tag = 'input window, operand 1, single buffered']
    #allocation6 [shape = 's32[1]{0}', space=sflag, size = 0x4, scoped, tag = 'scoped memory for _lambda_.1']
    #allocation7 [shape = 'u8[32768]{0}', space=vmem, size = 0x8000, scoped, tag = 'input window, operand 2, single buffered']
    #allocation8 [shape = 'u8[512]{0}', space=vmem, size = 0x400, scoped, tag = 'input window, operand 3, single buffered']
    #allocation9 [shape = 's32[1]{0}', space=sflag, size = 0x4, scoped, tag = 'scoped memory for _lambda_.1']
    #allocation10 [shape = 'u8[32768]{0}', space=vmem, size = 0x8000, scoped, tag = 'input window, operand 4, single buffered']
    #allocation11 [shape = 'u8[512]{0}', space=vmem, size = 0x400, scoped, tag = 'input window, operand 5, single buffered']
    #allocation12 [shape = 's32[1]{0}', space=sflag, size = 0x4, scoped, tag = 'scoped memory for _lambda_.1']
    #allocation13 [shape = 'u8[32768]{0}', space=vmem, size = 0x8000, scoped, tag = 'input window, operand 6, single buffered']
    #allocation14 [shape = 'u8[8192]{0}', space=vmem, size = 0x2000, scoped, tag = 'input window, operand 7, single buffered']
    #allocation15 [shape = 's32[1]{0}', space=sflag, size = 0x4, scoped, tag = 'scoped memory for _lambda_.1']
    #allocation16 [shape = 'u8[512]{0}', space=vmem, size = 0x400, scoped, tag = 'input window, operand 8, single buffered']
    #allocation17 [shape = 'u8[32768]{0}', space=vmem, size = 0x8000, scoped, tag = 'input window, operand 9, single buffered']
    #allocation18 [shape = 's32[1]{0}', space=sflag, size = 0x4, scoped, tag = 'scoped memory for _lambda_.1']
    #allocation19 [shape = 'u8[512]{0}', space=vmem, size = 0x400, scoped, tag = 'input window, operand 10, single buffered']
    #allocation20 [shape = 'u8[32768]{0}', space=vmem, size = 0x8000, scoped, tag = 'input window, operand 11, single buffered']
    #allocation21 [shape = 's32[1]{0}', space=sflag, size = 0x4, scoped, tag = 'scoped memory for _lambda_.1']
    #allocation22 [shape = 'u8[512]{0}', space=vmem, size = 0x400, scoped, tag = 'input window, operand 12, single buffered']
    #allocation23 [shape = 'u8[24576]{0}', space=vmem, size = 0x6000, scoped, tag = 'input window, operand 13, single buffered']
    #allocation24 [shape = 's32[1]{0}', space=sflag, size = 0x4, scoped, tag = 'scoped memory for _lambda_.1']
    #allocation25 [shape = 'u8[512]{0}', space=vmem, size = 0x400, scoped, tag = 'input window, operand 14, single buffered']
    #allocation26 [shape = 'u8[36864]{0}', space=vmem, size = 0x9000, scoped, tag = 'input window, operand 15, single buffered']
    #allocation27 [shape = 's32[1]{0}', space=sflag, size = 0x4, scoped, tag = 'scoped memory for _lambda_.1']
    #allocation28 [shape = 'u8[512]{0}', space=vmem, size = 0x400, scoped, tag = 'input window, operand 16, single buffered']
    #allocation29 [shape = 'u8[4096]{0}', space=vmem, size = 0x1000, scoped, tag = 'output window, operand 0, single buffered']
    %22 = vsyncpa [#allocation3], 0
    %23 = vsyncpa [#allocation6], 0
    %24 = vsyncpa [#allocation9], 0
    %25 = vsyncpa [#allocation12], 0
    %26 = vsyncpa [#allocation15], 0
    %27 = vsyncpa [#allocation18], 0
    %28 = vsyncpa [#allocation21], 0
    %29 = vsyncpa [#allocation24], 0
    %30 = vsyncpa [#allocation27], 0
    %31 = vsyncpa [#allocation4], 0
    // Predicated region
    $region2: #{_lambda_.1} parent=1 // pred_check
      _
    $region3: #{_lambda_.1} parent=1 // pred_check_branch
      %33 = sbr.rel (0) target = $region5
    $region4: #{_lambda_.1} parent=1 // pred_region
      %s35 = ssub.s32 128, 128
      %36 = vsyncadd [#allocation3], %s35
      %s37 = sshll.u32 [#allocation2], 4
      %s38 = int_to_ptr.vmem [resolvable:$true] %s37
      %43 = dma.hbm_to_vmem [thread:$0]  %s0, 128, %s38, [#allocation3], 64, 64, 4
    $region5: #{_lambda_.1} parent=1 // pred_fallthru
      _
    // Predicated region
    $region6: #{_lambda_.1} parent=1 // pred_check
      _
    $region7: #{_lambda_.1} parent=1 // pred_check_branch
      %45 = sbr.rel (0) target = $region9
    $region8: #{_lambda_.1} parent=1 // pred_region
      %s47 = ssub.s32 16, 16
      %48 = vsyncadd [#allocation6], %s47
      %s50 = sshll.u32 [#allocation5], 4
      %s51 = int_to_ptr.vmem [resolvable:$true] %s50
      %53 = dma.hbm_to_vmem [thread:$0]  %s1, 16, %s51, [#allocation6]
    $region9: #{_lambda_.1} parent=1 // pred_fallthru
      _
    // Predicated region
    $region10: #{_lambda_.1} parent=1 // pred_check
      _
    $region11: #{_lambda_.1} parent=1 // pred_check_branch
      %55 = sbr.rel (0) target = $region13
    $region12: #{_lambda_.1} parent=1 // pred_region
      %s57 = ssub.s32 1024, 1024
      %58 = vsyncadd [#allocation6], %s57
      %s59 = sshll.u32 [#allocation7], 4
      %s60 = int_to_ptr.vmem [resolvable:$true] %s59
      %65 = dma.hbm_to_vmem [thread:$0]  %s2, 1024, %s60, [#allocation6], 64, 64, 4
    $region13: #{_lambda_.1} parent=1 // pred_fallthru
      _
    // Predicated region
    $region14: #{_lambda_.1} parent=1 // pred_check
      _
    $region15: #{_lambda_.1} parent=1 // pred_check_branch
      %67 = sbr.rel (0) target = $region17
    $region16: #{_lambda_.1} parent=1 // pred_region
      %s69 = ssub.s32 16, 16
      %70 = vsyncadd [#allocation9], %s69
      %s72 = sshll.u32 [#allocation8], 4
      %s73 = int_to_ptr.vmem [resolvable:$true] %s72
      %75 = dma.hbm_to_vmem [thread:$0]  %s3, 16, %s73, [#allocation9]
    $region17: #{_lambda_.1} parent=1 // pred_fallthru
      _
    // Predicated region
    $region18: #{_lambda_.1} parent=1 // pred_check
      _
    $region19: #{_lambda_.1} parent=1 // pred_check_branch
      %77 = sbr.rel (0) target = $region21
    $region20: #{_lambda_.1} parent=1 // pred_region
      %s79 = ssub.s32 1024, 1024
      %80 = vsyncadd [#allocation9], %s79
      %s81 = sshll.u32 [#allocation10], 4
      %s82 = int_to_ptr.vmem [resolvable:$true] %s81
      %87 = dma.hbm_to_vmem [thread:$0]  %s4, 1024, %s82, [#allocation9], 64, 64, 4
    $region21: #{_lambda_.1} parent=1 // pred_fallthru
      _
    // Predicated region
    $region22: #{_lambda_.1} parent=1 // pred_check
      _
    $region23: #{_lambda_.1} parent=1 // pred_check_branch
      %89 = sbr.rel (0) target = $region25
    $region24: #{_lambda_.1} parent=1 // pred_region
      %s91 = ssub.s32 16, 16
      %92 = vsyncadd [#allocation12], %s91
      %s94 = sshll.u32 [#allocation11], 4
      %s95 = int_to_ptr.vmem [resolvable:$true] %s94
      %97 = dma.hbm_to_vmem [thread:$0]  %s5, 16, %s95, [#allocation12]
    $region25: #{_lambda_.1} parent=1 // pred_fallthru
      _
    // Predicated region
    $region26: #{_lambda_.1} parent=1 // pred_check
      _
    $region27: #{_lambda_.1} parent=1 // pred_check_branch
      %99 = sbr.rel (0) target = $region29
    $region28: #{_lambda_.1} parent=1 // pred_region
      %s101 = ssub.s32 1024, 1024
      %102 = vsyncadd [#allocation12], %s101
      %s103 = sshll.u32 [#allocation13], 4
      %s104 = int_to_ptr.vmem [resolvable:$true] %s103
      %109 = dma.hbm_to_vmem [thread:$0]  %s6, 1024, %s104, [#allocation12], 64, 64, 4
    $region29: #{_lambda_.1} parent=1 // pred_fallthru
      _
    // Predicated region
    $region30: #{_lambda_.1} parent=1 // pred_check
      _
    $region31: #{_lambda_.1} parent=1 // pred_check_branch
      %111 = sbr.rel (0) target = $region33
    $region32: #{_lambda_.1} parent=1 // pred_region
      %s113 = ssub.s32 256, 256
      %114 = vsyncadd [#allocation15], %s113
      %s115 = sshll.u32 [#allocation14], 4
      %s116 = int_to_ptr.vmem [resolvable:$true] %s115
      %121 = dma.hbm_to_vmem [thread:$0]  %s7, 256, %s116, [#allocation15], 64, 64, 4
    $region33: #{_lambda_.1} parent=1 // pred_fallthru
      _
    // Predicated region
    $region34: #{_lambda_.1} parent=1 // pred_check
      _
    $region35: #{_lambda_.1} parent=1 // pred_check_branch
      %123 = sbr.rel (0) target = $region37
    $region36: #{_lambda_.1} parent=1 // pred_region
      %s125 = ssub.s32 16, 16
      %126 = vsyncadd [#allocation15], %s125
      %s128 = sshll.u32 [#allocation16], 4
      %s129 = int_to_ptr.vmem [resolvable:$true] %s128
      %131 = dma.hbm_to_vmem [thread:$0]  %s8, 16, %s129, [#allocation15]
    $region37: #{_lambda_.1} parent=1 // pred_fallthru
      _
    // Predicated region
    $region38: #{_lambda_.1} parent=1 // pred_check
      _
    $region39: #{_lambda_.1} parent=1 // pred_check_branch
      %133 = sbr.rel (0) target = $region41
    $region40: #{_lambda_.1} parent=1 // pred_region
      %s135 = ssub.s32 1024, 1024
      %136 = vsyncadd [#allocation18], %s135
      %s137 = sshll.u32 [#allocation17], 4
      %s138 = int_to_ptr.vmem [resolvable:$true] %s137
      %143 = dma.hbm_to_vmem [thread:$0]  %s9, 1024, %s138, [#allocation18], 64, 64, 4
    $region41: #{_lambda_.1} parent=1 // pred_fallthru
      _
    // Predicated region
    $region42: #{_lambda_.1} parent=1 // pred_check
      _
    $region43: #{_lambda_.1} parent=1 // pred_check_branch
      %145 = sbr.rel (0) target = $region45
    $region44: #{_lambda_.1} parent=1 // pred_region
      %s147 = ssub.s32 16, 16
      %148 = vsyncadd [#allocation18], %s147
      %s150 = sshll.u32 [#allocation19], 4
      %s151 = int_to_ptr.vmem [resolvable:$true] %s150
      %153 = dma.hbm_to_vmem [thread:$0]  %s10, 16, %s151, [#allocation18]
    $region45: #{_lambda_.1} parent=1 // pred_fallthru
      _
    // Predicated region
    $region46: #{_lambda_.1} parent=1 // pred_check
      _
    $region47: #{_lambda_.1} parent=1 // pred_check_branch
      %155 = sbr.rel (0) target = $region49
    $region48: #{_lambda_.1} parent=1 // pred_region
      %s157 = ssub.s32 1024, 1024
      %158 = vsyncadd [#allocation21], %s157
      %s159 = sshll.u32 [#allocation20], 4
      %s160 = int_to_ptr.vmem [resolvable:$true] %s159
      %165 = dma.hbm_to_vmem [thread:$0]  %s11, 1024, %s160, [#allocation21], 64, 64, 4
    $region49: #{_lambda_.1} parent=1 // pred_fallthru
      _
    // Predicated region
    $region50: #{_lambda_.1} parent=1 // pred_check
      _
    $region51: #{_lambda_.1} parent=1 // pred_check_branch
      %167 = sbr.rel (0) target = $region53
    $region52: #{_lambda_.1} parent=1 // pred_region
      %s169 = ssub.s32 16, 16
      %170 = vsyncadd [#allocation21], %s169
      %s172 = sshll.u32 [#allocation22], 4
      %s173 = int_to_ptr.vmem [resolvable:$true] %s172
      %175 = dma.hbm_to_vmem [thread:$0]  %s12, 16, %s173, [#allocation21]
    $region53: #{_lambda_.1} parent=1 // pred_fallthru
      _
    // Predicated region
    $region54: #{_lambda_.1} parent=1 // pred_check
      _
    $region55: #{_lambda_.1} parent=1 // pred_check_branch
      %177 = sbr.rel (0) target = $region57
    $region56: #{_lambda_.1} parent=1 // pred_region
      %s179 = ssub.s32 768, 768
      %180 = vsyncadd [#allocation24], %s179
      %s181 = sshll.u32 [#allocation23], 4
      %s182 = int_to_ptr.vmem [resolvable:$true] %s181
      %187 = dma.hbm_to_vmem [thread:$0]  %s13, 768, %s182, [#allocation24], 128, 128, 8
    $region57: #{_lambda_.1} parent=1 // pred_fallthru
      _
    // Predicated region
    $region58: #{_lambda_.1} parent=1 // pred_check
      _
    $region59: #{_lambda_.1} parent=1 // pred_check_branch
      %189 = sbr.rel (0) target = $region61
    $region60: #{_lambda_.1} parent=1 // pred_region
      %s191 = ssub.s32 16, 16
      %192 = vsyncadd [#allocation24], %s191
      %s194 = sshll.u32 [#allocation25], 4
      %s195 = int_to_ptr.vmem [resolvable:$true] %s194
      %197 = dma.hbm_to_vmem [thread:$0]  %s14, 16, %s195, [#allocation24]
    $region61: #{_lambda_.1} parent=1 // pred_fallthru
      _
    // Predicated region
    $region62: #{_lambda_.1} parent=1 // pred_check
      _
    $region63: #{_lambda_.1} parent=1 // pred_check_branch
      %199 = sbr.rel (0) target = $region65
    $region64: #{_lambda_.1} parent=1 // pred_region
      %s201 = ssub.s32 1152, 1152
      %202 = vsyncadd [#allocation27], %s201
      %s203 = sshll.u32 [#allocation26], 4
      %s204 = int_to_ptr.vmem [resolvable:$true] %s203
      %209 = dma.hbm_to_vmem [thread:$0]  %s15, 1152, %s204, [#allocation27], 128, 128, 8
    $region65: #{_lambda_.1} parent=1 // pred_fallthru
      _
    // Predicated region
    $region66: #{_lambda_.1} parent=1 // pred_check
      _
    $region67: #{_lambda_.1} parent=1 // pred_check_branch
      %211 = sbr.rel (0) target = $region69
    $region68: #{_lambda_.1} parent=1 // pred_region
      %s213 = ssub.s32 16, 16
      %214 = vsyncadd [#allocation27], %s213
      %s216 = sshll.u32 [#allocation28], 4
      %s217 = int_to_ptr.vmem [resolvable:$true] %s216
      %219 = dma.hbm_to_vmem [thread:$0]  %s16, 16, %s217, [#allocation27]
    $region69: #{_lambda_.1} parent=1 // pred_fallthru
      _
    // Predicated region
    $region70: #{_lambda_.1} parent=1 // pred_check
      _
    $region71: #{_lambda_.1} parent=1 // pred_check_branch
      %221 = sbr.rel (0) target = $region73
    $region72: #{_lambda_.1} parent=1 // pred_region
      %222 = dma.done [#allocation3], 128
    $region73: #{_lambda_.1} parent=1 // pred_fallthru
      _
    // Predicated region
    $region74: #{_lambda_.1} parent=1 // pred_check
      _
    $region75: #{_lambda_.1} parent=1 // pred_check_branch
      %224 = sbr.rel (0) target = $region77
    $region76: #{_lambda_.1} parent=1 // pred_region
      %225 = dma.done [#allocation6], 16
    $region77: #{_lambda_.1} parent=1 // pred_fallthru
      _
    // Predicated region
    $region78: #{_lambda_.1} parent=1 // pred_check
      _
    $region79: #{_lambda_.1} parent=1 // pred_check_branch
      %227 = sbr.rel (0) target = $region81
    $region80: #{_lambda_.1} parent=1 // pred_region
      %228 = dma.done [#allocation6], 1024
    $region81: #{_lambda_.1} parent=1 // pred_fallthru
      _
    // Predicated region
    $region82: #{_lambda_.1} parent=1 // pred_check
      _
    $region83: #{_lambda_.1} parent=1 // pred_check_branch
      %230 = sbr.rel (0) target = $region85
    $region84: #{_lambda_.1} parent=1 // pred_region
      %231 = dma.done [#allocation9], 16
    $region85: #{_lambda_.1} parent=1 // pred_fallthru
      _
    // Predicated region
    $region86: #{_lambda_.1} parent=1 // pred_check
      _
    $region87: #{_lambda_.1} parent=1 // pred_check_branch
      %233 = sbr.rel (0) target = $region89
    $region88: #{_lambda_.1} parent=1 // pred_region
      %234 = dma.done [#allocation9], 1024
    $region89: #{_lambda_.1} parent=1 // pred_fallthru
      _
    // Predicated region
    $region90: #{_lambda_.1} parent=1 // pred_check
      _
    $region91: #{_lambda_.1} parent=1 // pred_check_branch
      %236 = sbr.rel (0) target = $region93
    $region92: #{_lambda_.1} parent=1 // pred_region
      %237 = dma.done [#allocation12], 16
    $region93: #{_lambda_.1} parent=1 // pred_fallthru
      _
    // Predicated region
    $region94: #{_lambda_.1} parent=1 // pred_check
      _
    $region95: #{_lambda_.1} parent=1 // pred_check_branch
      %239 = sbr.rel (0) target = $region97
    $region96: #{_lambda_.1} parent=1 // pred_region
      %240 = dma.done [#allocation12], 1024
    $region97: #{_lambda_.1} parent=1 // pred_fallthru
      _
    // Predicated region
    $region98: #{_lambda_.1} parent=1 // pred_check
      _
    $region99: #{_lambda_.1} parent=1 // pred_check_branch
      %242 = sbr.rel (0) target = $region101
    $region100: #{_lambda_.1} parent=1 // pred_region
      %243 = dma.done [#allocation15], 256
    $region101: #{_lambda_.1} parent=1 // pred_fallthru
      _
    // Predicated region
    $region102: #{_lambda_.1} parent=1 // pred_check
      _
    $region103: #{_lambda_.1} parent=1 // pred_check_branch
      %245 = sbr.rel (0) target = $region105
    $region104: #{_lambda_.1} parent=1 // pred_region
      %246 = dma.done [#allocation15], 16
    $region105: #{_lambda_.1} parent=1 // pred_fallthru
      _
    // Predicated region
    $region106: #{_lambda_.1} parent=1 // pred_check
      _
    $region107: #{_lambda_.1} parent=1 // pred_check_branch
      %248 = sbr.rel (0) target = $region109
    $region108: #{_lambda_.1} parent=1 // pred_region
      %249 = dma.done [#allocation18], 1024
    $region109: #{_lambda_.1} parent=1 // pred_fallthru
      _
    // Predicated region
    $region110: #{_lambda_.1} parent=1 // pred_check
      _
    $region111: #{_lambda_.1} parent=1 // pred_check_branch
      %251 = sbr.rel (0) target = $region113
    $region112: #{_lambda_.1} parent=1 // pred_region
      %252 = dma.done [#allocation18], 16
    $region113: #{_lambda_.1} parent=1 // pred_fallthru
      _
    // Predicated region
    $region114: #{_lambda_.1} parent=1 // pred_check
      _
    $region115: #{_lambda_.1} parent=1 // pred_check_branch
      %254 = sbr.rel (0) target = $region117
    $region116: #{_lambda_.1} parent=1 // pred_region
      %255 = dma.done [#allocation21], 1024
    $region117: #{_lambda_.1} parent=1 // pred_fallthru
      _
    // Predicated region
    $region118: #{_lambda_.1} parent=1 // pred_check
      _
    $region119: #{_lambda_.1} parent=1 // pred_check_branch
      %257 = sbr.rel (0) target = $region121
    $region120: #{_lambda_.1} parent=1 // pred_region
      %258 = dma.done [#allocation21], 16
    $region121: #{_lambda_.1} parent=1 // pred_fallthru
      _
    // Predicated region
    $region122: #{_lambda_.1} parent=1 // pred_check
      _
    $region123: #{_lambda_.1} parent=1 // pred_check_branch
      %260 = sbr.rel (0) target = $region125
    $region124: #{_lambda_.1} parent=1 // pred_region
      %261 = dma.done [#allocation24], 768
    $region125: #{_lambda_.1} parent=1 // pred_fallthru
      _
    // Predicated region
    $region126: #{_lambda_.1} parent=1 // pred_check
      _
    $region127: #{_lambda_.1} parent=1 // pred_check_branch
      %263 = sbr.rel (0) target = $region129
    $region128: #{_lambda_.1} parent=1 // pred_region
      %264 = dma.done [#allocation24], 16
    $region129: #{_lambda_.1} parent=1 // pred_fallthru
      _
    // Predicated region
    $region130: #{_lambda_.1} parent=1 // pred_check
      _
    $region131: #{_lambda_.1} parent=1 // pred_check_branch
      %266 = sbr.rel (0) target = $region133
    $region132: #{_lambda_.1} parent=1 // pred_region
      %267 = dma.done [#allocation27], 1152
    $region133: #{_lambda_.1} parent=1 // pred_fallthru
      _
    // Predicated region
    $region134: #{_lambda_.1} parent=1 // pred_check
      _
    $region135: #{_lambda_.1} parent=1 // pred_check_branch
      %269 = sbr.rel (0) target = $region137
    $region136: #{_lambda_.1} parent=1 // pred_region
      %270 = dma.done [#allocation27], 16
    $region137: #{_lambda_.1} parent=1 // pred_fallthru
      _
    %v272 = vld [vmem:[#allocation2] sm:$0xf]
    %v273 = vld [vmem:[#allocation2 + $0x4] sm:$0xf]
    %v274 = vld [vmem:[#allocation7] sm:$0xf]
    %v275 = vld [vmem:[#allocation7 + $0x4] sm:$0xf]
    %v276 = vld [vmem:[#allocation7 + $0x8] sm:$0xf]
    %v277 = vld [vmem:[#allocation7 + $0xc] sm:$0xf]
    %v278 = vld [vmem:[#allocation7 + $0x10] sm:$0xf]
    %v279 = vld [vmem:[#allocation7 + $0x14] sm:$0xf]
    %v280 = vld [vmem:[#allocation7 + $0x18] sm:$0xf]
    %v281 = vld [vmem:[#allocation7 + $0x1c] sm:$0xf]
    %v282 = vld [vmem:[#allocation7 + $0x20] sm:$0xf]
    %v283 = vld [vmem:[#allocation7 + $0x24] sm:$0xf]
    %v284 = vld [vmem:[#allocation7 + $0x28] sm:$0xf]
    %v285 = vld [vmem:[#allocation7 + $0x2c] sm:$0xf]
    %v286 = vld [vmem:[#allocation7 + $0x30] sm:$0xf]
    %v287 = vld [vmem:[#allocation7 + $0x34] sm:$0xf]
    %v288 = vld [vmem:[#allocation7 + $0x38] sm:$0xf]
    %v289 = vld [vmem:[#allocation7 + $0x3c] sm:$0xf]
    %v290 = vld [vmem:[#allocation8] sm:$0x1]
    %v292 = vlaneseq
    %v293 = vshrl.u32 %v292, 7
    %v294 = vsub.s32 0, %v293
    %v295 = vrot.slane %v290, %v294
    %v299 = vunpack.c.l.b16 %v272
    %v300 = vunpack.c.l.b16 %v273
    %v301 = vpack.c.b16 %v300, %v299
    %v319 = vunpack.c.l.b16 %v274
    %v320 = vunpack.c.l.b16 %v275
    %v321 = vunpack.c.l.b16 %v276
    %v322 = vunpack.c.l.b16 %v277
    %v323 = vunpack.c.l.b16 %v278
    %v324 = vunpack.c.l.b16 %v279
    %v325 = vunpack.c.l.b16 %v280
    %v326 = vunpack.c.l.b16 %v281
    %v327 = vunpack.c.l.b16 %v282
    %v328 = vunpack.c.l.b16 %v283
    %v329 = vunpack.c.l.b16 %v284
    %v330 = vunpack.c.l.b16 %v285
    %v331 = vunpack.c.l.b16 %v286
    %v332 = vunpack.c.l.b16 %v287
    %v333 = vunpack.c.l.b16 %v288
    %v334 = vunpack.c.l.b16 %v289
    %v335 = vpack.c.b16 %v320, %v319
    %v336 = vpack.c.b16 %v322, %v321
    %v337 = vpack.c.b16 %v324, %v323
    %v338 = vpack.c.b16 %v326, %v325
    %v339 = vpack.c.b16 %v328, %v327
    %v340 = vpack.c.b16 %v330, %v329
    %v341 = vpack.c.b16 %v332, %v331
    %v342 = vpack.c.b16 %v334, %v333
    %351 = vmatprep.subr.bf16.mxu0 0
    %352 = vmatpush1.bf16.msra.mxu0 %v335
    %353 = vmatprep.subr.bf16.mxu0 0
    %354 = vmatpush1.bf16.msra.mxu0 %v336
    %355 = vmatprep.subr.bf16.mxu0 0
    %356 = vmatpush1.bf16.msra.mxu0 %v337
    %357 = vmatprep.subr.bf16.mxu0 0
    %358 = vmatpush1.bf16.msra.mxu0 %v338
    %359 = vmatprep.subr.bf16.mxu0 0
    %360 = vmatpush1.bf16.msra.mxu0 %v339
    %361 = vmatprep.subr.bf16.mxu0 0
    %362 = vmatpush1.bf16.msra.mxu0 %v340
    %363 = vmatprep.subr.bf16.mxu0 0
    %364 = vmatpush1.bf16.msra.mxu0 %v341
    %365 = vmatprep.subr.bf16.mxu0 0
    %366 = vmatpush1.bf16.msra.mxu0 %v342
    %367 = vmatprep.subr.bf16.mxu0 0
    %368 = vmatpush1.bf16.msra.mxu0 0
    %369 = vmatprep.subr.bf16.mxu0 0
    %370 = vmatpush1.bf16.msra.mxu0 0
    %371 = vmatprep.subr.bf16.mxu0 0
    %372 = vmatpush1.bf16.msra.mxu0 0
    %373 = vmatprep.subr.bf16.mxu0 0
    %374 = vmatpush1.bf16.msra.mxu0 0
    %375 = vmatprep.subr.bf16.mxu0 0
    %376 = vmatpush1.bf16.msra.mxu0 0
    %377 = vmatprep.subr.bf16.mxu0 0
    %378 = vmatpush1.bf16.msra.mxu0 0
    %379 = vmatprep.subr.bf16.mxu0 0
    %380 = vmatpush1.bf16.msra.mxu0 0
    %381 = vmatprep.subr.bf16.mxu0 0
    %382 = vmatpush1.bf16.msra.mxu0 0
    %383 = vmatprep.mubr.bf16.mxu0 0
    %384 = vmatmul.mubr.bf16.gmra.mrb[0].mxu0 %v301
    %v385 = vpop.f32.mrb[0].mxu0
    %v386 = vadd.f32 %v295, %v385
    %v387 = vpop.f32.mrb[0].mxu0
    %v388 = vpop.f32.mrb[0].mxu0
    %v389 = vadd.f32 %v295, %v388
    %v390 = vpop.f32.mrb[0].mxu0
    %391 = vdwg.mxu0
    %v392 = vmax.f32 %v386, 0.0
    %v393 = vmax.f32 %v389, 0.0
    %v394 = vpack.c.bf16 %v393, %v392
    %v395 = vld [vmem:[#allocation10] sm:$0xf]
    %v396 = vld [vmem:[#allocation10 + $0x4] sm:$0xf]
    %v397 = vld [vmem:[#allocation10 + $0x8] sm:$0xf]
    %v398 = vld [vmem:[#allocation10 + $0xc] sm:$0xf]
    %v399 = vld [vmem:[#allocation10 + $0x10] sm:$0xf]
    %v400 = vld [vmem:[#allocation10 + $0x14] sm:$0xf]
    %v401 = vld [vmem:[#allocation10 + $0x18] sm:$0xf]
    %v402 = vld [vmem:[#allocation10 + $0x1c] sm:$0xf]
    %v403 = vld [vmem:[#allocation10 + $0x20] sm:$0xf]
    %v404 = vld [vmem:[#allocation10 + $0x24] sm:$0xf]
    %v405 = vld [vmem:[#allocation10 + $0x28] sm:$0xf]
    %v406 = vld [vmem:[#allocation10 + $0x2c] sm:$0xf]
    %v407 = vld [vmem:[#allocation10 + $0x30] sm:$0xf]
    %v408 = vld [vmem:[#allocation10 + $0x34] sm:$0xf]
    %v409 = vld [vmem:[#allocation10 + $0x38] sm:$0xf]
    %v410 = vld [vmem:[#allocation10 + $0x3c] sm:$0xf]
    %v411 = vld [vmem:[#allocation11] sm:$0x1]
    %v413 = vlaneseq
    %v414 = vshrl.u32 %v413, 7
    %v415 = vsub.s32 0, %v414
    %v416 = vrot.slane %v411, %v415
    %v434 = vunpack.c.l.b16 %v395
    %v435 = vunpack.c.l.b16 %v396
    %v436 = vunpack.c.l.b16 %v397
    %v437 = vunpack.c.l.b16 %v398
    %v438 = vunpack.c.l.b16 %v399
    %v439 = vunpack.c.l.b16 %v400
    %v440 = vunpack.c.l.b16 %v401
    %v441 = vunpack.c.l.b16 %v402
    %v442 = vunpack.c.l.b16 %v403
    %v443 = vunpack.c.l.b16 %v404
    %v444 = vunpack.c.l.b16 %v405
    %v445 = vunpack.c.l.b16 %v406
    %v446 = vunpack.c.l.b16 %v407
    %v447 = vunpack.c.l.b16 %v408
    %v448 = vunpack.c.l.b16 %v409
    %v449 = vunpack.c.l.b16 %v410
    %v450 = vpack.c.b16 %v435, %v434
    %v451 = vpack.c.b16 %v437, %v436
    %v452 = vpack.c.b16 %v439, %v438
    %v453 = vpack.c.b16 %v441, %v440
    %v454 = vpack.c.b16 %v443, %v442
    %v455 = vpack.c.b16 %v445, %v444
    %v456 = vpack.c.b16 %v447, %v446
    %v457 = vpack.c.b16 %v449, %v448
    %466 = vmatprep.subr.bf16.mxu0 0
    %467 = vmatpush1.bf16.msra.mxu0 %v450
    %468 = vmatprep.subr.bf16.mxu0 0
    %469 = vmatpush1.bf16.msra.mxu0 %v451
    %470 = vmatprep.subr.bf16.mxu0 0
    %471 = vmatpush1.bf16.msra.mxu0 %v452
    %472 = vmatprep.subr.bf16.mxu0 0
    %473 = vmatpush1.bf16.msra.mxu0 %v453
    %474 = vmatprep.subr.bf16.mxu0 0
    %475 = vmatpush1.bf16.msra.mxu0 %v454
    %476 = vmatprep.subr.bf16.mxu0 0
    %477 = vmatpush1.bf16.msra.mxu0 %v455
    %478 = vmatprep.subr.bf16.mxu0 0
    %479 = vmatpush1.bf16.msra.mxu0 %v456
    %480 = vmatprep.subr.bf16.mxu0 0
    %481 = vmatpush1.bf16.msra.mxu0 %v457
    %482 = vmatprep.subr.bf16.mxu0 0
    %483 = vmatpush1.bf16.msra.mxu0 0
    %484 = vmatprep.subr.bf16.mxu0 0
    %485 = vmatpush1.bf16.msra.mxu0 0
    %486 = vmatprep.subr.bf16.mxu0 0
    %487 = vmatpush1.bf16.msra.mxu0 0
    %488 = vmatprep.subr.bf16.mxu0 0
    %489 = vmatpush1.bf16.msra.mxu0 0
    %490 = vmatprep.subr.bf16.mxu0 0
    %491 = vmatpush1.bf16.msra.mxu0 0
    %492 = vmatprep.subr.bf16.mxu0 0
    %493 = vmatpush1.bf16.msra.mxu0 0
    %494 = vmatprep.subr.bf16.mxu0 0
    %495 = vmatpush1.bf16.msra.mxu0 0
    %496 = vmatprep.subr.bf16.mxu0 0
    %497 = vmatpush1.bf16.msra.mxu0 0
    %498 = vmatprep.mubr.bf16.mxu0 0
    %499 = vmatmul.mubr.bf16.gmra.mrb[0].mxu0 %v394
    %v500 = vpop.f32.mrb[0].mxu0
    %v501 = vadd.f32 %v416, %v500
    %v502 = vpop.f32.mrb[0].mxu0
    %v503 = vpop.f32.mrb[0].mxu0
    %v504 = vadd.f32 %v416, %v503
    %v505 = vpop.f32.mrb[0].mxu0
    %506 = vdwg.mxu0
    %v507 = vmax.f32 %v501, 0.0
    %v508 = vmax.f32 %v504, 0.0
    %v509 = vld [vmem:[#allocation13] sm:$0xf]
    %v510 = vld [vmem:[#allocation13 + $0x4] sm:$0xf]
    %v511 = vld [vmem:[#allocation13 + $0x8] sm:$0xf]
    %v512 = vld [vmem:[#allocation13 + $0xc] sm:$0xf]
    %v513 = vld [vmem:[#allocation13 + $0x10] sm:$0xf]
    %v514 = vld [vmem:[#allocation13 + $0x14] sm:$0xf]
    %v515 = vld [vmem:[#allocation13 + $0x18] sm:$0xf]
    %v516 = vld [vmem:[#allocation13 + $0x1c] sm:$0xf]
    %v517 = vld [vmem:[#allocation13 + $0x20] sm:$0xf]
    %v518 = vld [vmem:[#allocation13 + $0x24] sm:$0xf]
    %v519 = vld [vmem:[#allocation13 + $0x28] sm:$0xf]
    %v520 = vld [vmem:[#allocation13 + $0x2c] sm:$0xf]
    %v521 = vld [vmem:[#allocation13 + $0x30] sm:$0xf]
    %v522 = vld [vmem:[#allocation13 + $0x34] sm:$0xf]
    %v523 = vld [vmem:[#allocation13 + $0x38] sm:$0xf]
    %v524 = vld [vmem:[#allocation13 + $0x3c] sm:$0xf]
    %v525 = vld [vmem:[#allocation14] sm:$0xf]
    %v526 = vld [vmem:[#allocation14 + $0x4] sm:$0xf]
    %v527 = vld [vmem:[#allocation14 + $0x8] sm:$0xf]
    %v528 = vld [vmem:[#allocation14 + $0xc] sm:$0xf]
    %v529 = vld [vmem:[#allocation16] sm:$0x1]
    %v530 = vld [vmem:[#allocation23] sm:$0xff]
    %v531 = vld [vmem:[#allocation23 + $0x8] sm:$0xff]
    %v532 = vld [vmem:[#allocation23 + $0x10] sm:$0xff]
    %v533 = vld [vmem:[#allocation23 + $0x18] sm:$0xff]
    %v534 = vld [vmem:[#allocation23 + $0x20] sm:$0xff]
    %v535 = vld [vmem:[#allocation23 + $0x28] sm:$0xff]
    %v536 = vld [vmem:[#allocation25] sm:$0x1]
    %v537 = vpack.c.bf16 %v508, %v507
    %v539 = vlaneseq
    %v540 = vshrl.u32 %v539, 7
    %v541 = vsub.s32 0, %v540
    %v542 = vrot.slane %v529, %v541
    %v560 = vunpack.c.l.b16 %v509
    %v561 = vunpack.c.l.b16 %v510
    %v562 = vunpack.c.l.b16 %v511
    %v563 = vunpack.c.l.b16 %v512
    %v564 = vunpack.c.l.b16 %v513
    %v565 = vunpack.c.l.b16 %v514
    %v566 = vunpack.c.l.b16 %v515
    %v567 = vunpack.c.l.b16 %v516
    %v568 = vunpack.c.l.b16 %v517
    %v569 = vunpack.c.l.b16 %v518
    %v570 = vunpack.c.l.b16 %v519
    %v571 = vunpack.c.l.b16 %v520
    %v572 = vunpack.c.l.b16 %v521
    %v573 = vunpack.c.l.b16 %v522
    %v574 = vunpack.c.l.b16 %v523
    %v575 = vunpack.c.l.b16 %v524
    %v576 = vpack.c.b16 %v561, %v560
    %v577 = vpack.c.b16 %v563, %v562
    %v578 = vpack.c.b16 %v565, %v564
    %v579 = vpack.c.b16 %v567, %v566
    %v580 = vpack.c.b16 %v569, %v568
    %v581 = vpack.c.b16 %v571, %v570
    %v582 = vpack.c.b16 %v573, %v572
    %v583 = vpack.c.b16 %v575, %v574
    %592 = vmatprep.subr.bf16.mxu0 0
    %593 = vmatpush1.bf16.msra.mxu0 %v576
    %594 = vmatprep.subr.bf16.mxu0 0
    %595 = vmatpush1.bf16.msra.mxu0 %v577
    %596 = vmatprep.subr.bf16.mxu0 0
    %597 = vmatpush1.bf16.msra.mxu0 %v578
    %598 = vmatprep.subr.bf16.mxu0 0
    %599 = vmatpush1.bf16.msra.mxu0 %v579
    %600 = vmatprep.subr.bf16.mxu0 0
    %601 = vmatpush1.bf16.msra.mxu0 %v580
    %602 = vmatprep.subr.bf16.mxu0 0
    %603 = vmatpush1.bf16.msra.mxu0 %v581
    %604 = vmatprep.subr.bf16.mxu0 0
    %605 = vmatpush1.bf16.msra.mxu0 %v582
    %606 = vmatprep.subr.bf16.mxu0 0
    %607 = vmatpush1.bf16.msra.mxu0 %v583
    %608 = vmatprep.subr.bf16.mxu0 0
    %609 = vmatpush1.bf16.msra.mxu0 0
    %610 = vmatprep.subr.bf16.mxu0 0
    %611 = vmatpush1.bf16.msra.mxu0 0
    %612 = vmatprep.subr.bf16.mxu0 0
    %613 = vmatpush1.bf16.msra.mxu0 0
    %614 = vmatprep.subr.bf16.mxu0 0
    %615 = vmatpush1.bf16.msra.mxu0 0
    %616 = vmatprep.subr.bf16.mxu0 0
    %617 = vmatpush1.bf16.msra.mxu0 0
    %618 = vmatprep.subr.bf16.mxu0 0
    %619 = vmatpush1.bf16.msra.mxu0 0
    %620 = vmatprep.subr.bf16.mxu0 0
    %621 = vmatpush1.bf16.msra.mxu0 0
    %622 = vmatprep.subr.bf16.mxu0 0
    %623 = vmatpush1.bf16.msra.mxu0 0
    %624 = vmatprep.mubr.bf16.mxu0 0
    %625 = vmatmul.mubr.bf16.gmra.mrb[0].mxu0 %v537
    %v626 = vpop.f32.mrb[0].mxu0
    %v627 = vadd.f32 %v542, %v626
    %v628 = vpop.f32.mrb[0].mxu0
    %v629 = vpop.f32.mrb[0].mxu0
    %v630 = vadd.f32 %v542, %v629
    %v631 = vpop.f32.mrb[0].mxu0
    %632 = vdwg.mxu0
    %v633 = vpack.c.bf16 %v630, %v627
    %v634 = vlaneseq
    %v635 = vand.u32 %v634, 127
    %636 = vset.pattern.permute.xlu0 0
    %637 = vperm.xlu0 %636, %v530
    %v638 = vpop.permute.xlu0 %637
    %639 = vset.pattern.permute.xlu0 0
    %640 = vperm.xlu0 %639, %v531
    %v641 = vpop.permute.xlu0 %640
    %642 = vset.pattern.permute.xlu0 0
    %643 = vperm.xlu0 %642, %v532
    %v644 = vpop.permute.xlu0 %643
    %645 = vset.pattern.permute.xlu0 0
    %646 = vperm.xlu0 %645, %v533
    %v647 = vpop.permute.xlu0 %646
    %648 = vset.pattern.permute.xlu0 0
    %649 = vperm.xlu0 %648, %v534
    %v650 = vpop.permute.xlu0 %649
    %651 = vset.pattern.permute.xlu0 0
    %652 = vperm.xlu0 %651, %v535
    %v653 = vpop.permute.xlu0 %652
    %vm654 = vcmp.eq.s32.totalorder %v635, %v638
    %vm655 = vcmp.eq.s32.totalorder %v635, %v641
    %vm656 = vcmp.eq.s32.totalorder %v635, %v644
    %vm657 = vcmp.eq.s32.totalorder %v635, %v647
    %vm658 = vcmp.eq.s32.totalorder %v635, %v650
    %vm659 = vcmp.eq.s32.totalorder %v635, %v653
    %v660 = vsel %vm654, 1, 0
    %v661 = vsel %vm655, 1, 0
    %v662 = vsel %vm656, 1, 0
    %v663 = vsel %vm657, 1, 0
    %v664 = vsel %vm658, 1, 0
    %v665 = vsel %vm659, 1, 0
    %v666 = vcvt.s32.f32 %v660
    %v667 = vcvt.s32.f32 %v661
    %v668 = vcvt.s32.f32 %v662
    %v669 = vcvt.s32.f32 %v663
    %v670 = vcvt.s32.f32 %v664
    %v671 = vcvt.s32.f32 %v665
    %v672 = vpack.c.bf16 %v667, %v666
    %v673 = vpack.c.bf16 %v669, %v668
    %v674 = vpack.c.bf16 %v671, %v670
    %vm675 = vcmask 130048
    %v677 = vsel %vm675, %v672, 0
    %v680 = vsel %vm675, %v673, 0
    %v683 = vsel %vm675, %v674, 0
    %685 = vmatprep.subr.bf16.mxu0 0
    %686 = vmatpush1.bf16.msra.mxu0 %v633
    %687 = vmatprep.subr.bf16.mxu0 0
    %688 = vmatpush1.bf16.msra.mxu0 0
    %689 = vmatprep.subr.bf16.mxu0 0
    %690 = vmatpush1.bf16.msra.mxu0 0
    %691 = vmatprep.subr.bf16.mxu0 0
    %692 = vmatpush1.bf16.msra.mxu0 0
    %693 = vmatprep.subr.bf16.mxu0 0
    %694 = vmatpush1.bf16.msra.mxu0 0
    %695 = vmatprep.subr.bf16.mxu0 0
    %696 = vmatpush1.bf16.msra.mxu0 0
    %697 = vmatprep.subr.bf16.mxu0 0
    %698 = vmatpush1.bf16.msra.mxu0 0
    %699 = vmatprep.subr.bf16.mxu0 0
    %700 = vmatpush1.bf16.msra.mxu0 0
    %701 = vmatprep.subr.bf16.mxu0 0
    %702 = vmatpush1.bf16.msra.mxu0 0
    %703 = vmatprep.subr.bf16.mxu0 0
    %704 = vmatpush1.bf16.msra.mxu0 0
    %705 = vmatprep.subr.bf16.mxu0 0
    %706 = vmatpush1.bf16.msra.mxu0 0
    %707 = vmatprep.subr.bf16.mxu0 0
    %708 = vmatpush1.bf16.msra.mxu0 0
    %709 = vmatprep.subr.bf16.mxu0 0
    %710 = vmatpush1.bf16.msra.mxu0 0
    %711 = vmatprep.subr.bf16.mxu0 0
    %712 = vmatpush1.bf16.msra.mxu0 0
    %713 = vmatprep.subr.bf16.mxu0 0
    %714 = vmatpush1.bf16.msra.mxu0 0
    %715 = vmatprep.subr.bf16.mxu0 0
    %716 = vmatpush1.bf16.msra.mxu0 0
    %717 = vmatprep.mubr.bf16.mxu0 0
    %718 = vmatmul.mubr.bf16.gmra.mrb[0].mxu0 %v677
    %v719 = vpop.f32.mrb[0].mxu0
    %v720 = vadd.f32 0.0, %v719
    %v721 = vpop.f32.mrb[0].mxu0
    %v722 = vpop.f32.mrb[0].mxu0
    %v723 = vadd.f32 0.0, %v722
    %v724 = vpop.f32.mrb[0].mxu0
    %725 = vmatprep.mubr.bf16.mxu0 0
    %726 = vmatmul.mubr.bf16.gmra.mrb[0].mxu0 %v680
    %v727 = vpop.f32.mrb[0].mxu0
    %v728 = vadd.f32 0.0, %v727
    %v729 = vpop.f32.mrb[0].mxu0
    %v730 = vpop.f32.mrb[0].mxu0
    %v731 = vadd.f32 0.0, %v730
    %v732 = vpop.f32.mrb[0].mxu0
    %733 = vmatprep.mubr.bf16.mxu0 0
    %734 = vmatmul.mubr.bf16.gmra.mrb[0].mxu0 %v683
    %v735 = vpop.f32.mrb[0].mxu0
    %v736 = vadd.f32 0.0, %v735
    %v737 = vpop.f32.mrb[0].mxu0
    %v738 = vpop.f32.mrb[0].mxu0
    %v739 = vadd.f32 0.0, %v738
    %v740 = vpop.f32.mrb[0].mxu0
    %741 = vdwg.mxu0
    %v742 = vlaneseq
    %v743 = vshrl.u32 %v742, 7
    %v744 = vadd.s32 %v743, 8
    %v745 = vlaneseq
    %v746 = vshrl.u32 %v745, 7
    %v747 = vsub.s32 0, %v746
    %v748 = vrot.slane %v536, %v747
    %vm749 = vcmp.eq.s32.totalorder %v743, %v748
    %vm750 = vcmp.eq.s32.totalorder %v744, %v748
    %v751 = vsel %vm749, 1, 0
    %v752 = vsel %vm750, 1, 0
    %v753 = vcvt.s32.f32 %v751
    %v754 = vcvt.s32.f32 %v752
    %v755 = vpack.c.bf16 %v754, %v753
    %v756 = vxor.u32 %v720, 2147483648
    %v757 = vxor.u32 %v723, 2147483648
    %v758 = vxor.u32 %v728, 2147483648
    %v759 = vmul.f32 %v756, 1.442695
    %v760 = vpow.pop %v759
    %v761 = vmul.f32 %v757, 1.442695
    %v762 = vpow.pop %v761
    %v763 = vmul.f32 %v758, 1.442695
    %v764 = vpow.pop %v763
    %v765 = vadd.f32 %v760, 1.0
    %v766 = vadd.f32 %v762, 1.0
    %v767 = vadd.f32 %v764, 1.0
    %v768 = vrcp.pop %v765
    %v769 = vmul.f32 1.0, %v768
    %v770 = vrcp.pop %v766
    %v771 = vmul.f32 1.0, %v770
    %v772 = vrcp.pop %v767
    %v773 = vmul.f32 1.0, %v772
    %v774 = vtanh.pop %v720
    %v775 = vtanh.pop %v723
    %v776 = vtanh.pop %v728
    %v777 = vmul.f32 %v769, 0.0
    %v778 = vmul.f32 %v771, 0.0
    %v779 = vmul.f32 %v773, 0.0
    %783 = vrot.lane.b32.xlu0 %v774, 32
    %v784 = vpop.permute.xlu0 %783
    %785 = vrot.lane.b32.xlu0 %v775, 32
    %v786 = vpop.permute.xlu0 %785
    %787 = vrot.lane.b32.xlu0 %v776, 32
    %v788 = vpop.permute.xlu0 %787
    %v792 = vmul.f32 %v769, %v784
    %v793 = vmul.f32 %v771, %v786
    %v794 = vmul.f32 %v773, %v788
    %798 = vrot.lane.b32.xlu0 %v792, 32
    %v799 = vpop.permute.xlu0 %798
    %800 = vrot.lane.b32.xlu0 %v793, 32
    %v801 = vpop.permute.xlu0 %800
    %802 = vrot.lane.b32.xlu0 %v794, 32
    %v803 = vpop.permute.xlu0 %802
    %v807 = vadd.f32 %v777, %v799
    %v808 = vadd.f32 %v778, %v801
    %v809 = vadd.f32 %v779, %v803
    %v810 = vtanh.pop %v807
    %v811 = vtanh.pop %v808
    %v812 = vtanh.pop %v809
    %816 = vrot.lane.b32.xlu0 %v810, 32
    %v817 = vpop.permute.xlu0 %816
    %818 = vrot.lane.b32.xlu0 %v811, 32
    %v819 = vpop.permute.xlu0 %818
    %820 = vrot.lane.b32.xlu0 %v812, 32
    %v821 = vpop.permute.xlu0 %820
    %v825 = vmul.f32 %v769, %v817
    %v826 = vmul.f32 %v771, %v819
    %v827 = vmul.f32 %v773, %v821
    %v828 = vpack.c.bf16 %v826, %v825
    %v829 = vpack.c.bf16 %v827, %v827
    %832 = vrot.lane.b32.xlu0 %v828, 64
    %v833 = vpop.permute.xlu0 %832
    %834 = vrot.lane.b32.xlu0 %v829, 64
    %v835 = vpop.permute.xlu0 %834
    %v840 = vunpack.c.l.b16 %v525
    %v841 = vunpack.c.l.b16 %v526
    %v842 = vunpack.c.l.b16 %v527
    %v843 = vunpack.c.l.b16 %v528
    %v844 = vpack.c.b16 %v841, %v840
    %v845 = vpack.c.b16 %v843, %v842
    %vm848 = vcmask 261120
    %v850 = vsel %vm848, %v833, 0
    %v853 = vsel %vm848, %v835, 0
    %855 = vmatprep.subr.bf16.mxu0 0
    %856 = vmatpush1.bf16.msra.mxu0 %v844
    %857 = vmatprep.subr.bf16.mxu0 0
    %858 = vmatpush1.bf16.msra.mxu0 %v845
    %859 = vmatprep.subr.bf16.mxu0 0
    %860 = vmatpush1.bf16.msra.mxu0 0
    %861 = vmatprep.subr.bf16.mxu0 0
    %862 = vmatpush1.bf16.msra.mxu0 0
    %863 = vmatprep.subr.bf16.mxu0 0
    %864 = vmatpush1.bf16.msra.mxu0 0
    %865 = vmatprep.subr.bf16.mxu0 0
    %866 = vmatpush1.bf16.msra.mxu0 0
    %867 = vmatprep.subr.bf16.mxu0 0
    %868 = vmatpush1.bf16.msra.mxu0 0
    %869 = vmatprep.subr.bf16.mxu0 0
    %870 = vmatpush1.bf16.msra.mxu0 0
    %871 = vmatprep.subr.bf16.mxu0 0
    %872 = vmatpush1.bf16.msra.mxu0 0
    %873 = vmatprep.subr.bf16.mxu0 0
    %874 = vmatpush1.bf16.msra.mxu0 0
    %875 = vmatprep.subr.bf16.mxu0 0
    %876 = vmatpush1.bf16.msra.mxu0 0
    %877 = vmatprep.subr.bf16.mxu0 0
    %878 = vmatpush1.bf16.msra.mxu0 0
    %879 = vmatprep.subr.bf16.mxu0 0
    %880 = vmatpush1.bf16.msra.mxu0 0
    %881 = vmatprep.subr.bf16.mxu0 0
    %882 = vmatpush1.bf16.msra.mxu0 0
    %883 = vmatprep.subr.bf16.mxu0 0
    %884 = vmatpush1.bf16.msra.mxu0 0
    %885 = vmatprep.subr.bf16.mxu0 0
    %886 = vmatpush1.bf16.msra.mxu0 0
    %887 = vmatprep.mubr.bf16.mxu0 0
    %888 = vmatmul.mubr.bf16.gmra.mrb[0].mxu0 %v850
    %v889 = vpop.f32.mrb[0].mxu0
    %v890 = vadd.f32 0.0, %v889
    %v891 = vpop.f32.mrb[0].mxu0
    %v892 = vpop.f32.mrb[0].mxu0
    %v893 = vadd.f32 0.0, %v892
    %v894 = vpop.f32.mrb[0].mxu0
    %895 = vmatprep.mubr.bf16.mxu0 0
    %896 = vmatmul.mubr.bf16.gmra.mrb[0].mxu0 %v853
    %v897 = vpop.f32.mrb[0].mxu0
    %v898 = vadd.f32 0.0, %v897
    %v899 = vpop.f32.mrb[0].mxu0
    %v900 = vpop.f32.mrb[0].mxu0
    %v901 = vpop.f32.mrb[0].mxu0
    %902 = vdwg.mxu0
    %v903 = vadd.f32 %v731, %v890
    %v904 = vadd.f32 %v736, %v893
    %v905 = vadd.f32 %v739, %v898
    %v906 = vxor.u32 %v903, 2147483648
    %v907 = vxor.u32 %v904, 2147483648
    %v908 = vxor.u32 %v905, 2147483648
    %v909 = vmul.f32 %v906, 1.442695
    %v910 = vpow.pop %v909
    %v911 = vmul.f32 %v907, 1.442695
    %v912 = vpow.pop %v911
    %v913 = vmul.f32 %v908, 1.442695
    %v914 = vpow.pop %v913
    %v915 = vadd.f32 %v910, 1.0
    %v916 = vadd.f32 %v912, 1.0
    %v917 = vadd.f32 %v914, 1.0
    %v918 = vrcp.pop %v915
    %v919 = vmul.f32 1.0, %v918
    %v920 = vrcp.pop %v916
    %v921 = vmul.f32 1.0, %v920
    %v922 = vrcp.pop %v917
    %v923 = vmul.f32 1.0, %v922
    %v924 = vtanh.pop %v903
    %v925 = vtanh.pop %v904
    %v926 = vtanh.pop %v905
    %v927 = vmul.f32 %v919, %v807
    %v928 = vmul.f32 %v921, %v808
    %v929 = vmul.f32 %v923, %v809
    %933 = vrot.lane.b32.xlu0 %v924, 32
    %v934 = vpop.permute.xlu0 %933
    %935 = vrot.lane.b32.xlu0 %v925, 32
    %v936 = vpop.permute.xlu0 %935
    %937 = vrot.lane.b32.xlu0 %v926, 32
    %v938 = vpop.permute.xlu0 %937
    %v942 = vmul.f32 %v919, %v934
    %v943 = vmul.f32 %v921, %v936
    %v944 = vmul.f32 %v923, %v938
    %948 = vrot.lane.b32.xlu0 %v942, 32
    %v949 = vpop.permute.xlu0 %948
    %950 = vrot.lane.b32.xlu0 %v943, 32
    %v951 = vpop.permute.xlu0 %950
    %952 = vrot.lane.b32.xlu0 %v944, 32
    %v953 = vpop.permute.xlu0 %952
    %v957 = vadd.f32 %v927, %v949
    %v958 = vadd.f32 %v928, %v951
    %v959 = vadd.f32 %v929, %v953
    %v960 = vtanh.pop %v957
    %v961 = vtanh.pop %v958
    %v962 = vtanh.pop %v959
    %966 = vrot.lane.b32.xlu0 %v960, 32
    %v967 = vpop.permute.xlu0 %966
    %968 = vrot.lane.b32.xlu0 %v961, 32
    %v969 = vpop.permute.xlu0 %968
    %970 = vrot.lane.b32.xlu0 %v962, 32
    %v971 = vpop.permute.xlu0 %970
    %v975 = vmul.f32 %v919, %v967
    %v976 = vmul.f32 %v921, %v969
    %v977 = vmul.f32 %v923, %v971
    %v978 = vpack.c.bf16 %v976, %v975
    %v979 = vpack.c.bf16 %v977, %v977
    %982 = vrot.lane.b32.xlu0 %v978, 64
    %v983 = vpop.permute.xlu0 %982
    %984 = vrot.lane.b32.xlu0 %v979, 64
    %v985 = vpop.permute.xlu0 %984
    %vm987 = vcmask 195584
    %v989 = vsel %vm987, %v755, 0
    %vm991 = vcmask 1043456
    %v993 = vsel %vm991, %v985, 0
    %995 = vmatprep.subr.bf16.mxu0 0
    %996 = vmatpush1.bf16.msra.mxu0 %v983
    %997 = vmatprep.subr.bf16.mxu0 0
    %998 = vmatpush1.bf16.msra.mxu0 %v993
    %999 = vmatprep.subr.bf16.mxu0 0
    %1000 = vmatpush1.bf16.msra.mxu0 0
    %1001 = vmatprep.subr.bf16.mxu0 0
    %1002 = vmatpush1.bf16.msra.mxu0 0
    %1003 = vmatprep.subr.bf16.mxu0 0
    %1004 = vmatpush1.bf16.msra.mxu0 0
    %1005 = vmatprep.subr.bf16.mxu0 0
    %1006 = vmatpush1.bf16.msra.mxu0 0
    %1007 = vmatprep.subr.bf16.mxu0 0
    %1008 = vmatpush1.bf16.msra.mxu0 0
    %1009 = vmatprep.subr.bf16.mxu0 0
    %1010 = vmatpush1.bf16.msra.mxu0 0
    %1011 = vmatprep.subr.bf16.mxu0 0
    %1012 = vmatpush1.bf16.msra.mxu0 0
    %1013 = vmatprep.subr.bf16.mxu0 0
    %1014 = vmatpush1.bf16.msra.mxu0 0
    %1015 = vmatprep.subr.bf16.mxu0 0
    %1016 = vmatpush1.bf16.msra.mxu0 0
    %1017 = vmatprep.subr.bf16.mxu0 0
    %1018 = vmatpush1.bf16.msra.mxu0 0
    %1019 = vmatprep.subr.bf16.mxu0 0
    %1020 = vmatpush1.bf16.msra.mxu0 0
    %1021 = vmatprep.subr.bf16.mxu0 0
    %1022 = vmatpush1.bf16.msra.mxu0 0
    %1023 = vmatprep.subr.bf16.mxu0 0
    %1024 = vmatpush1.bf16.msra.mxu0 0
    %1025 = vmatprep.subr.bf16.mxu0 0
    %1026 = vmatpush1.bf16.msra.mxu0 0
    %1027 = vmatprep.mubr.bf16.mxu0 0
    %1028 = vmatmul.mubr.bf16.gmra.mrb[0].mxu0 %v989
    %v1029 = vpop.f32.mrb[0].mxu0
    %v1030 = vadd.f32 0.0, %v1029
    %v1031 = vpop.f32.mrb[0].mxu0
    %v1032 = vpop.f32.mrb[0].mxu0
    %v1033 = vadd.f32 0.0, %v1032
    %v1034 = vpop.f32.mrb[0].mxu0
    %1035 = vdwg.mxu0
    %v1036 = vsel %vm848, %v1030, 0.0
    %v1037 = vsel %vm848, %v1033, 0.0
    %v1038 = vadd.f32 %v1036, %v507
    %v1039 = vadd.f32 %v1037, %v508
    %v1040 = vmax.f32 %v1038, 0.0
    %v1041 = vmax.f32 %v1039, 0.0
    %v1042 = vld [vmem:[#allocation26] sm:$0xff]
    %v1043 = vld [vmem:[#allocation26 + $0x8] sm:$0xff]
    %v1044 = vld [vmem:[#allocation26 + $0x10] sm:$0xff]
    %v1045 = vld [vmem:[#allocation26 + $0x18] sm:$0xff]
    %v1046 = vld [vmem:[#allocation26 + $0x20] sm:$0xff]
    %v1047 = vld [vmem:[#allocation26 + $0x28] sm:$0xff]
    %v1048 = vld [vmem:[#allocation26 + $0x30] sm:$0xff]
    %v1049 = vld [vmem:[#allocation26 + $0x38] sm:$0xff]
    %v1050 = vld [vmem:[#allocation26 + $0x40] sm:$0xff]
    %v1051 = vld [vmem:[#allocation28] sm:$0x1]
    %v1052 = vpack.c.bf16 %v1041, %v1040
    %1053 = vmatprep.subr.bf16.mxu0 0
    %1054 = vmatpush1.bf16.msra.mxu0 %v576
    %1055 = vmatprep.subr.bf16.mxu0 0
    %1056 = vmatpush1.bf16.msra.mxu0 %v577
    %1057 = vmatprep.subr.bf16.mxu0 0
    %1058 = vmatpush1.bf16.msra.mxu0 %v578
    %1059 = vmatprep.subr.bf16.mxu0 0
    %1060 = vmatpush1.bf16.msra.mxu0 %v579
    %1061 = vmatprep.subr.bf16.mxu0 0
    %1062 = vmatpush1.bf16.msra.mxu0 %v580
    %1063 = vmatprep.subr.bf16.mxu0 0
    %1064 = vmatpush1.bf16.msra.mxu0 %v581
    %1065 = vmatprep.subr.bf16.mxu0 0
    %1066 = vmatpush1.bf16.msra.mxu0 %v582
    %1067 = vmatprep.subr.bf16.mxu0 0
    %1068 = vmatpush1.bf16.msra.mxu0 %v583
    %1069 = vmatprep.subr.bf16.mxu0 0
    %1070 = vmatpush1.bf16.msra.mxu0 0
    %1071 = vmatprep.subr.bf16.mxu0 0
    %1072 = vmatpush1.bf16.msra.mxu0 0
    %1073 = vmatprep.subr.bf16.mxu0 0
    %1074 = vmatpush1.bf16.msra.mxu0 0
    %1075 = vmatprep.subr.bf16.mxu0 0
    %1076 = vmatpush1.bf16.msra.mxu0 0
    %1077 = vmatprep.subr.bf16.mxu0 0
    %1078 = vmatpush1.bf16.msra.mxu0 0
    %1079 = vmatprep.subr.bf16.mxu0 0
    %1080 = vmatpush1.bf16.msra.mxu0 0
    %1081 = vmatprep.subr.bf16.mxu0 0
    %1082 = vmatpush1.bf16.msra.mxu0 0
    %1083 = vmatprep.subr.bf16.mxu0 0
    %1084 = vmatpush1.bf16.msra.mxu0 0
    %1085 = vmatprep.mubr.bf16.mxu0 0
    %1086 = vmatmul.mubr.bf16.gmra.mrb[0].mxu0 %v1052
    %v1087 = vpop.f32.mrb[0].mxu0
    %v1088 = vadd.f32 %v542, %v1087
    %v1089 = vpop.f32.mrb[0].mxu0
    %v1090 = vpop.f32.mrb[0].mxu0
    %v1091 = vadd.f32 %v542, %v1090
    %v1092 = vpop.f32.mrb[0].mxu0
    %1093 = vdwg.mxu0
    %v1094 = vpack.c.bf16 %v1091, %v1088
    %1095 = vset.pattern.permute.xlu0 0
    %1096 = vperm.xlu0 %1095, %v1042
    %v1097 = vpop.permute.xlu0 %1096
    %1098 = vset.pattern.permute.xlu0 0
    %1099 = vperm.xlu0 %1098, %v1043
    %v1100 = vpop.permute.xlu0 %1099
    %1101 = vset.pattern.permute.xlu0 0
    %1102 = vperm.xlu0 %1101, %v1044
    %v1103 = vpop.permute.xlu0 %1102
    %1104 = vset.pattern.permute.xlu0 0
    %1105 = vperm.xlu0 %1104, %v1045
    %v1106 = vpop.permute.xlu0 %1105
    %1107 = vset.pattern.permute.xlu0 0
    %1108 = vperm.xlu0 %1107, %v1046
    %v1109 = vpop.permute.xlu0 %1108
    %1110 = vset.pattern.permute.xlu0 0
    %1111 = vperm.xlu0 %1110, %v1047
    %v1112 = vpop.permute.xlu0 %1111
    %1113 = vset.pattern.permute.xlu0 0
    %1114 = vperm.xlu0 %1113, %v1048
    %v1115 = vpop.permute.xlu0 %1114
    %1116 = vset.pattern.permute.xlu0 0
    %1117 = vperm.xlu0 %1116, %v1049
    %v1118 = vpop.permute.xlu0 %1117
    %1119 = vset.pattern.permute.xlu0 0
    %1120 = vperm.xlu0 %1119, %v1050
    %v1121 = vpop.permute.xlu0 %1120
    %vm1122 = vcmp.eq.s32.totalorder %v635, %v1097
    %vm1123 = vcmp.eq.s32.totalorder %v635, %v1100
    %vm1124 = vcmp.eq.s32.totalorder %v635, %v1103
    %vm1125 = vcmp.eq.s32.totalorder %v635, %v1106
    %vm1126 = vcmp.eq.s32.totalorder %v635, %v1109
    %vm1127 = vcmp.eq.s32.totalorder %v635, %v1112
    %vm1128 = vcmp.eq.s32.totalorder %v635, %v1115
    %vm1129 = vcmp.eq.s32.totalorder %v635, %v1118
    %vm1130 = vcmp.eq.s32.totalorder %v635, %v1121
    %v1131 = vsel %vm1122, 1, 0
    %v1132 = vsel %vm1123, 1, 0
    %v1133 = vsel %vm1124, 1, 0
    %v1134 = vsel %vm1125, 1, 0
    %v1135 = vsel %vm1126, 1, 0
    %v1136 = vsel %vm1127, 1, 0
    %v1137 = vsel %vm1128, 1, 0
    %v1138 = vsel %vm1129, 1, 0
    %v1139 = vsel %vm1130, 1, 0
    %v1140 = vcvt.s32.f32 %v1131
    %v1141 = vcvt.s32.f32 %v1132
    %v1142 = vcvt.s32.f32 %v1133
    %v1143 = vcvt.s32.f32 %v1134
    %v1144 = vcvt.s32.f32 %v1135
    %v1145 = vcvt.s32.f32 %v1136
    %v1146 = vcvt.s32.f32 %v1137
    %v1147 = vcvt.s32.f32 %v1138
    %v1148 = vcvt.s32.f32 %v1139
    %v1149 = vpack.c.bf16 %v1141, %v1140
    %v1150 = vpack.c.bf16 %v1143, %v1142
    %v1151 = vpack.c.bf16 %v1145, %v1144
    %v1152 = vpack.c.bf16 %v1147, %v1146
    %v1153 = vpack.c.bf16 %v1148, %v1148
    %v1155 = vsel %vm675, %v1149, 0
    %v1158 = vsel %vm675, %v1150, 0
    %v1161 = vsel %vm675, %v1151, 0
    %v1164 = vsel %vm675, %v1152, 0
    %v1167 = vsel %vm675, %v1153, 0
    %1169 = vmatprep.subr.bf16.mxu0 0
    %1170 = vmatpush1.bf16.msra.mxu0 %v1094
    %1171 = vmatprep.subr.bf16.mxu0 0
    %1172 = vmatpush1.bf16.msra.mxu0 0
    %1173 = vmatprep.subr.bf16.mxu0 0
    %1174 = vmatpush1.bf16.msra.mxu0 0
    %1175 = vmatprep.subr.bf16.mxu0 0
    %1176 = vmatpush1.bf16.msra.mxu0 0
    %1177 = vmatprep.subr.bf16.mxu0 0
    %1178 = vmatpush1.bf16.msra.mxu0 0
    %1179 = vmatprep.subr.bf16.mxu0 0
    %1180 = vmatpush1.bf16.msra.mxu0 0
    %1181 = vmatprep.subr.bf16.mxu0 0
    %1182 = vmatpush1.bf16.msra.mxu0 0
    %1183 = vmatprep.subr.bf16.mxu0 0
    %1184 = vmatpush1.bf16.msra.mxu0 0
    %1185 = vmatprep.subr.bf16.mxu0 0
    %1186 = vmatpush1.bf16.msra.mxu0 0
    %1187 = vmatprep.subr.bf16.mxu0 0
    %1188 = vmatpush1.bf16.msra.mxu0 0
    %1189 = vmatprep.subr.bf16.mxu0 0
    %1190 = vmatpush1.bf16.msra.mxu0 0
    %1191 = vmatprep.subr.bf16.mxu0 0
    %1192 = vmatpush1.bf16.msra.mxu0 0
    %1193 = vmatprep.subr.bf16.mxu0 0
    %1194 = vmatpush1.bf16.msra.mxu0 0
    %1195 = vmatprep.subr.bf16.mxu0 0
    %1196 = vmatpush1.bf16.msra.mxu0 0
    %1197 = vmatprep.subr.bf16.mxu0 0
    %1198 = vmatpush1.bf16.msra.mxu0 0
    %1199 = vmatprep.subr.bf16.mxu0 0
    %1200 = vmatpush1.bf16.msra.mxu0 0
    %1201 = vmatprep.mubr.bf16.mxu0 0
    %1202 = vmatmul.mubr.bf16.gmra.mrb[0].mxu0 %v1155
    %v1203 = vpop.f32.mrb[0].mxu0
    %v1204 = vadd.f32 0.0, %v1203
    %v1205 = vpop.f32.mrb[0].mxu0
    %v1206 = vpop.f32.mrb[0].mxu0
    %v1207 = vadd.f32 0.0, %v1206
    %v1208 = vpop.f32.mrb[0].mxu0
    %1209 = vmatprep.mubr.bf16.mxu0 0
    %1210 = vmatmul.mubr.bf16.gmra.mrb[0].mxu0 %v1158
    %v1211 = vpop.f32.mrb[0].mxu0
    %v1212 = vadd.f32 0.0, %v1211
    %v1213 = vpop.f32.mrb[0].mxu0
    %v1214 = vpop.f32.mrb[0].mxu0
    %v1215 = vadd.f32 0.0, %v1214
    %v1216 = vpop.f32.mrb[0].mxu0
    %1217 = vmatprep.mubr.bf16.mxu0 0
    %1218 = vmatmul.mubr.bf16.gmra.mrb[0].mxu0 %v1161
    %v1219 = vpop.f32.mrb[0].mxu0
    %v1220 = vadd.f32 0.0, %v1219
    %v1221 = vpop.f32.mrb[0].mxu0
    %v1222 = vpop.f32.mrb[0].mxu0
    %v1223 = vadd.f32 0.0, %v1222
    %v1224 = vpop.f32.mrb[0].mxu0
    %1225 = vmatprep.mubr.bf16.mxu0 0
    %1226 = vmatmul.mubr.bf16.gmra.mrb[0].mxu0 %v1164
    %v1227 = vpop.f32.mrb[0].mxu0
    %v1228 = vadd.f32 0.0, %v1227
    %v1229 = vpop.f32.mrb[0].mxu0
    %v1230 = vpop.f32.mrb[0].mxu0
    %v1231 = vadd.f32 0.0, %v1230
    %v1232 = vpop.f32.mrb[0].mxu0
    %1233 = vmatprep.mubr.bf16.mxu0 0
    %1234 = vmatmul.mubr.bf16.gmra.mrb[0].mxu0 %v1167
    %v1235 = vpop.f32.mrb[0].mxu0
    %v1236 = vadd.f32 0.0, %v1235
    %v1237 = vpop.f32.mrb[0].mxu0
    %v1238 = vpop.f32.mrb[0].mxu0
    %v1239 = vpop.f32.mrb[0].mxu0
    %1240 = vdwg.mxu0
    %v1241 = vlaneseq
    %v1242 = vshrl.u32 %v1241, 7
    %v1243 = vsub.s32 0, %v1242
    %v1244 = vrot.slane %v1051, %v1243
    %vm1245 = vcmp.eq.s32.totalorder %v743, %v1244
    %vm1246 = vcmp.eq.s32.totalorder %v744, %v1244
    %v1247 = vsel %vm1245, 1, 0
    %v1248 = vsel %vm1246, 1, 0
    %v1249 = vcvt.s32.f32 %v1247
    %v1250 = vcvt.s32.f32 %v1248
    %v1251 = vpack.c.bf16 %v1250, %v1249
    %v1252 = vxor.u32 %v1204, 2147483648
    %v1253 = vxor.u32 %v1207, 2147483648
    %v1254 = vxor.u32 %v1212, 2147483648
    %v1255 = vmul.f32 %v1252, 1.442695
    %v1256 = vpow.pop %v1255
    %v1257 = vmul.f32 %v1253, 1.442695
    %v1258 = vpow.pop %v1257
    %v1259 = vmul.f32 %v1254, 1.442695
    %v1260 = vpow.pop %v1259
    %v1261 = vadd.f32 %v1256, 1.0
    %v1262 = vadd.f32 %v1258, 1.0
    %v1263 = vadd.f32 %v1260, 1.0
    %v1264 = vrcp.pop %v1261
    %v1265 = vmul.f32 1.0, %v1264
    %v1266 = vrcp.pop %v1262
    %v1267 = vmul.f32 1.0, %v1266
    %v1268 = vrcp.pop %v1263
    %v1269 = vmul.f32 1.0, %v1268
    %v1270 = vtanh.pop %v1204
    %v1271 = vtanh.pop %v1207
    %v1272 = vtanh.pop %v1212
    %v1273 = vmul.f32 %v1265, 0.0
    %v1274 = vmul.f32 %v1267, 0.0
    %v1275 = vmul.f32 %v1269, 0.0
    %1279 = vrot.lane.b32.xlu0 %v1270, 32
    %v1280 = vpop.permute.xlu0 %1279
    %1281 = vrot.lane.b32.xlu0 %v1271, 32
    %v1282 = vpop.permute.xlu0 %1281
    %1283 = vrot.lane.b32.xlu0 %v1272, 32
    %v1284 = vpop.permute.xlu0 %1283
    %v1288 = vmul.f32 %v1265, %v1280
    %v1289 = vmul.f32 %v1267, %v1282
    %v1290 = vmul.f32 %v1269, %v1284
    %1294 = vrot.lane.b32.xlu0 %v1288, 32
    %v1295 = vpop.permute.xlu0 %1294
    %1296 = vrot.lane.b32.xlu0 %v1289, 32
    %v1297 = vpop.permute.xlu0 %1296
    %1298 = vrot.lane.b32.xlu0 %v1290, 32
    %v1299 = vpop.permute.xlu0 %1298
    %v1303 = vadd.f32 %v1273, %v1295
    %v1304 = vadd.f32 %v1274, %v1297
    %v1305 = vadd.f32 %v1275, %v1299
    %v1306 = vtanh.pop %v1303
    %v1307 = vtanh.pop %v1304
    %v1308 = vtanh.pop %v1305
    %1312 = vrot.lane.b32.xlu0 %v1306, 32
    %v1313 = vpop.permute.xlu0 %1312
    %1314 = vrot.lane.b32.xlu0 %v1307, 32
    %v1315 = vpop.permute.xlu0 %1314
    %1316 = vrot.lane.b32.xlu0 %v1308, 32
    %v1317 = vpop.permute.xlu0 %1316
    %v1321 = vmul.f32 %v1265, %v1313
    %v1322 = vmul.f32 %v1267, %v1315
    %v1323 = vmul.f32 %v1269, %v1317
    %v1324 = vpack.c.bf16 %v1322, %v1321
    %v1325 = vpack.c.bf16 %v1323, %v1323
    %1328 = vrot.lane.b32.xlu0 %v1324, 64
    %v1329 = vpop.permute.xlu0 %1328
    %1330 = vrot.lane.b32.xlu0 %v1325, 64
    %v1331 = vpop.permute.xlu0 %1330
    %v1333 = vsel %vm848, %v1329, 0
    %v1336 = vsel %vm848, %v1331, 0
    %1338 = vmatprep.subr.bf16.mxu0 0
    %1339 = vmatpush1.bf16.msra.mxu0 %v844
    %1340 = vmatprep.subr.bf16.mxu0 0
    %1341 = vmatpush1.bf16.msra.mxu0 %v845
    %1342 = vmatprep.subr.bf16.mxu0 0
    %1343 = vmatpush1.bf16.msra.mxu0 0
    %1344 = vmatprep.subr.bf16.mxu0 0
    %1345 = vmatpush1.bf16.msra.mxu0 0
    %1346 = vmatprep.subr.bf16.mxu0 0
    %1347 = vmatpush1.bf16.msra.mxu0 0
    %1348 = vmatprep.subr.bf16.mxu0 0
    %1349 = vmatpush1.bf16.msra.mxu0 0
    %1350 = vmatprep.subr.bf16.mxu0 0
    %1351 = vmatpush1.bf16.msra.mxu0 0
    %1352 = vmatprep.subr.bf16.mxu0 0
    %1353 = vmatpush1.bf16.msra.mxu0 0
    %1354 = vmatprep.subr.bf16.mxu0 0
    %1355 = vmatpush1.bf16.msra.mxu0 0
    %1356 = vmatprep.subr.bf16.mxu0 0
    %1357 = vmatpush1.bf16.msra.mxu0 0
    %1358 = vmatprep.subr.bf16.mxu0 0
    %1359 = vmatpush1.bf16.msra.mxu0 0
    %1360 = vmatprep.subr.bf16.mxu0 0
    %1361 = vmatpush1.bf16.msra.mxu0 0
    %1362 = vmatprep.subr.bf16.mxu0 0
    %1363 = vmatpush1.bf16.msra.mxu0 0
    %1364 = vmatprep.subr.bf16.mxu0 0
    %1365 = vmatpush1.bf16.msra.mxu0 0
    %1366 = vmatprep.subr.bf16.mxu0 0
    %1367 = vmatpush1.bf16.msra.mxu0 0
    %1368 = vmatprep.subr.bf16.mxu0 0
    %1369 = vmatpush1.bf16.msra.mxu0 0
    %1370 = vmatprep.mubr.bf16.mxu0 0
    %1371 = vmatmul.mubr.bf16.gmra.mrb[0].mxu0 %v1333
    %v1372 = vpop.f32.mrb[0].mxu0
    %v1373 = vadd.f32 0.0, %v1372
    %v1374 = vpop.f32.mrb[0].mxu0
    %v1375 = vpop.f32.mrb[0].mxu0
    %v1376 = vadd.f32 0.0, %v1375
    %v1377 = vpop.f32.mrb[0].mxu0
    %1378 = vmatprep.mubr.bf16.mxu0 0
    %1379 = vmatmul.mubr.bf16.gmra.mrb[0].mxu0 %v1336
    %v1380 = vpop.f32.mrb[0].mxu0
    %v1381 = vadd.f32 0.0, %v1380
    %v1382 = vpop.f32.mrb[0].mxu0
    %v1383 = vpop.f32.mrb[0].mxu0
    %v1384 = vpop.f32.mrb[0].mxu0
    %1385 = vdwg.mxu0
    %v1386 = vadd.f32 %v1215, %v1373
    %v1387 = vadd.f32 %v1220, %v1376
    %v1388 = vadd.f32 %v1223, %v1381
    %v1389 = vxor.u32 %v1386, 2147483648
    %v1390 = vxor.u32 %v1387, 2147483648
    %v1391 = vxor.u32 %v1388, 2147483648
    %v1392 = vmul.f32 %v1389, 1.442695
    %v1393 = vpow.pop %v1392
    %v1394 = vmul.f32 %v1390, 1.442695
    %v1395 = vpow.pop %v1394
    %v1396 = vmul.f32 %v1391, 1.442695
    %v1397 = vpow.pop %v1396
    %v1398 = vadd.f32 %v1393, 1.0
    %v1399 = vadd.f32 %v1395, 1.0
    %v1400 = vadd.f32 %v1397, 1.0
    %v1401 = vrcp.pop %v1398
    %v1402 = vmul.f32 1.0, %v1401
    %v1403 = vrcp.pop %v1399
    %v1404 = vmul.f32 1.0, %v1403
    %v1405 = vrcp.pop %v1400
    %v1406 = vmul.f32 1.0, %v1405
    %v1407 = vtanh.pop %v1386
    %v1408 = vtanh.pop %v1387
    %v1409 = vtanh.pop %v1388
    %v1410 = vmul.f32 %v1402, %v1303
    %v1411 = vmul.f32 %v1404, %v1304
    %v1412 = vmul.f32 %v1406, %v1305
    %1416 = vrot.lane.b32.xlu0 %v1407, 32
    %v1417 = vpop.permute.xlu0 %1416
    %1418 = vrot.lane.b32.xlu0 %v1408, 32
    %v1419 = vpop.permute.xlu0 %1418
    %1420 = vrot.lane.b32.xlu0 %v1409, 32
    %v1421 = vpop.permute.xlu0 %1420
    %v1425 = vmul.f32 %v1402, %v1417
    %v1426 = vmul.f32 %v1404, %v1419
    %v1427 = vmul.f32 %v1406, %v1421
    %1431 = vrot.lane.b32.xlu0 %v1425, 32
    %v1432 = vpop.permute.xlu0 %1431
    %1433 = vrot.lane.b32.xlu0 %v1426, 32
    %v1434 = vpop.permute.xlu0 %1433
    %1435 = vrot.lane.b32.xlu0 %v1427, 32
    %v1436 = vpop.permute.xlu0 %1435
    %v1440 = vadd.f32 %v1410, %v1432
    %v1441 = vadd.f32 %v1411, %v1434
    %v1442 = vadd.f32 %v1412, %v1436
    %v1443 = vtanh.pop %v1440
    %v1444 = vtanh.pop %v1441
    %v1445 = vtanh.pop %v1442
    %1449 = vrot.lane.b32.xlu0 %v1443, 32
    %v1450 = vpop.permute.xlu0 %1449
    %1451 = vrot.lane.b32.xlu0 %v1444, 32
    %v1452 = vpop.permute.xlu0 %1451
    %1453 = vrot.lane.b32.xlu0 %v1445, 32
    %v1454 = vpop.permute.xlu0 %1453
    %v1458 = vmul.f32 %v1402, %v1450
    %v1459 = vmul.f32 %v1404, %v1452
    %v1460 = vmul.f32 %v1406, %v1454
    %v1461 = vpack.c.bf16 %v1459, %v1458
    %v1462 = vpack.c.bf16 %v1460, %v1460
    %1465 = vrot.lane.b32.xlu0 %v1461, 64
    %v1466 = vpop.permute.xlu0 %1465
    %1467 = vrot.lane.b32.xlu0 %v1462, 64
    %v1468 = vpop.permute.xlu0 %1467
    %v1470 = vsel %vm848, %v1466, 0
    %v1473 = vsel %vm848, %v1468, 0
    %1475 = vmatprep.subr.bf16.mxu0 0
    %1476 = vmatpush1.bf16.msra.mxu0 %v844
    %1477 = vmatprep.subr.bf16.mxu0 0
    %1478 = vmatpush1.bf16.msra.mxu0 %v845
    %1479 = vmatprep.subr.bf16.mxu0 0
    %1480 = vmatpush1.bf16.msra.mxu0 0
    %1481 = vmatprep.subr.bf16.mxu0 0
    %1482 = vmatpush1.bf16.msra.mxu0 0
    %1483 = vmatprep.subr.bf16.mxu0 0
    %1484 = vmatpush1.bf16.msra.mxu0 0
    %1485 = vmatprep.subr.bf16.mxu0 0
    %1486 = vmatpush1.bf16.msra.mxu0 0
    %1487 = vmatprep.subr.bf16.mxu0 0
    %1488 = vmatpush1.bf16.msra.mxu0 0
    %1489 = vmatprep.subr.bf16.mxu0 0
    %1490 = vmatpush1.bf16.msra.mxu0 0
    %1491 = vmatprep.subr.bf16.mxu0 0
    %1492 = vmatpush1.bf16.msra.mxu0 0
    %1493 = vmatprep.subr.bf16.mxu0 0
    %1494 = vmatpush1.bf16.msra.mxu0 0
    %1495 = vmatprep.subr.bf16.mxu0 0
    %1496 = vmatpush1.bf16.msra.mxu0 0
    %1497 = vmatprep.subr.bf16.mxu0 0
    %1498 = vmatpush1.bf16.msra.mxu0 0
    %1499 = vmatprep.subr.bf16.mxu0 0
    %1500 = vmatpush1.bf16.msra.mxu0 0
    %1501 = vmatprep.subr.bf16.mxu0 0
    %1502 = vmatpush1.bf16.msra.mxu0 0
    %1503 = vmatprep.subr.bf16.mxu0 0
    %1504 = vmatpush1.bf16.msra.mxu0 0
    %1505 = vmatprep.subr.bf16.mxu0 0
    %1506 = vmatpush1.bf16.msra.mxu0 0
    %1507 = vmatprep.mubr.bf16.mxu0 0
    %1508 = vmatmul.mubr.bf16.gmra.mrb[0].mxu0 %v1470
    %v1509 = vpop.f32.mrb[0].mxu0
    %v1510 = vadd.f32 0.0, %v1509
    %v1511 = vpop.f32.mrb[0].mxu0
    %v1512 = vpop.f32.mrb[0].mxu0
    %v1513 = vadd.f32 0.0, %v1512
    %v1514 = vpop.f32.mrb[0].mxu0
    %1515 = vmatprep.mubr.bf16.mxu0 0
    %1516 = vmatmul.mubr.bf16.gmra.mrb[0].mxu0 %v1473
    %v1517 = vpop.f32.mrb[0].mxu0
    %v1518 = vadd.f32 0.0, %v1517
    %v1519 = vpop.f32.mrb[0].mxu0
    %v1520 = vpop.f32.mrb[0].mxu0
    %v1521 = vpop.f32.mrb[0].mxu0
    %1522 = vdwg.mxu0
    %v1523 = vadd.f32 %v1228, %v1510
    %v1524 = vadd.f32 %v1231, %v1513
    %v1525 = vadd.f32 %v1236, %v1518
    %v1526 = vxor.u32 %v1523, 2147483648
    %v1527 = vxor.u32 %v1524, 2147483648
    %v1528 = vxor.u32 %v1525, 2147483648
    %v1529 = vmul.f32 %v1526, 1.442695
    %v1530 = vpow.pop %v1529
    %v1531 = vmul.f32 %v1527, 1.442695
    %v1532 = vpow.pop %v1531
    %v1533 = vmul.f32 %v1528, 1.442695
    %v1534 = vpow.pop %v1533
    %v1535 = vadd.f32 %v1530, 1.0
    %v1536 = vadd.f32 %v1532, 1.0
    %v1537 = vadd.f32 %v1534, 1.0
    %v1538 = vrcp.pop %v1535
    %v1539 = vmul.f32 1.0, %v1538
    %v1540 = vrcp.pop %v1536
    %v1541 = vmul.f32 1.0, %v1540
    %v1542 = vrcp.pop %v1537
    %v1543 = vmul.f32 1.0, %v1542
    %v1544 = vtanh.pop %v1523
    %v1545 = vtanh.pop %v1524
    %v1546 = vtanh.pop %v1525
    %v1547 = vmul.f32 %v1539, %v1440
    %v1548 = vmul.f32 %v1541, %v1441
    %v1549 = vmul.f32 %v1543, %v1442
    %1553 = vrot.lane.b32.xlu0 %v1544, 32
    %v1554 = vpop.permute.xlu0 %1553
    %1555 = vrot.lane.b32.xlu0 %v1545, 32
    %v1556 = vpop.permute.xlu0 %1555
    %1557 = vrot.lane.b32.xlu0 %v1546, 32
    %v1558 = vpop.permute.xlu0 %1557
    %v1562 = vmul.f32 %v1539, %v1554
    %v1563 = vmul.f32 %v1541, %v1556
    %v1564 = vmul.f32 %v1543, %v1558
    %1568 = vrot.lane.b32.xlu0 %v1562, 32
    %v1569 = vpop.permute.xlu0 %1568
    %1570 = vrot.lane.b32.xlu0 %v1563, 32
    %v1571 = vpop.permute.xlu0 %1570
    %1572 = vrot.lane.b32.xlu0 %v1564, 32
    %v1573 = vpop.permute.xlu0 %1572
    %v1577 = vadd.f32 %v1547, %v1569
    %v1578 = vadd.f32 %v1548, %v1571
    %v1579 = vadd.f32 %v1549, %v1573
    %v1580 = vtanh.pop %v1577
    %v1581 = vtanh.pop %v1578
    %v1582 = vtanh.pop %v1579
    %1586 = vrot.lane.b32.xlu0 %v1580, 32
    %v1587 = vpop.permute.xlu0 %1586
    %1588 = vrot.lane.b32.xlu0 %v1581, 32
    %v1589 = vpop.permute.xlu0 %1588
    %1590 = vrot.lane.b32.xlu0 %v1582, 32
    %v1591 = vpop.permute.xlu0 %1590
    %v1595 = vmul.f32 %v1539, %v1587
    %v1596 = vmul.f32 %v1541, %v1589
    %v1597 = vmul.f32 %v1543, %v1591
    %v1598 = vpack.c.bf16 %v1596, %v1595
    %v1599 = vpack.c.bf16 %v1597, %v1597
    %1602 = vrot.lane.b32.xlu0 %v1598, 64
    %v1603 = vpop.permute.xlu0 %1602
    %1604 = vrot.lane.b32.xlu0 %v1599, 64
    %v1605 = vpop.permute.xlu0 %1604
    %v1608 = vsel %vm987, %v1251, 0
    %v1611 = vsel %vm991, %v1605, 0
    %1613 = vmatprep.subr.bf16.mxu0 0
    %1614 = vmatpush1.bf16.msra.mxu0 %v1603
    %1615 = vmatprep.subr.bf16.mxu0 0
    %1616 = vmatpush1.bf16.msra.mxu0 %v1611
    %1617 = vmatprep.subr.bf16.mxu0 0
    %1618 = vmatpush1.bf16.msra.mxu0 0
    %1619 = vmatprep.subr.bf16.mxu0 0
    %1620 = vmatpush1.bf16.msra.mxu0 0
    %1621 = vmatprep.subr.bf16.mxu0 0
    %1622 = vmatpush1.bf16.msra.mxu0 0
    %1623 = vmatprep.subr.bf16.mxu0 0
    %1624 = vmatpush1.bf16.msra.mxu0 0
    %1625 = vmatprep.subr.bf16.mxu0 0
    %1626 = vmatpush1.bf16.msra.mxu0 0
    %1627 = vmatprep.subr.bf16.mxu0 0
    %1628 = vmatpush1.bf16.msra.mxu0 0
    %1629 = vmatprep.subr.bf16.mxu0 0
    %1630 = vmatpush1.bf16.msra.mxu0 0
    %1631 = vmatprep.subr.bf16.mxu0 0
    %1632 = vmatpush1.bf16.msra.mxu0 0
    %1633 = vmatprep.subr.bf16.mxu0 0
    %1634 = vmatpush1.bf16.msra.mxu0 0
    %1635 = vmatprep.subr.bf16.mxu0 0
    %1636 = vmatpush1.bf16.msra.mxu0 0
    %1637 = vmatprep.subr.bf16.mxu0 0
    %1638 = vmatpush1.bf16.msra.mxu0 0
    %1639 = vmatprep.subr.bf16.mxu0 0
    %1640 = vmatpush1.bf16.msra.mxu0 0
    %1641 = vmatprep.subr.bf16.mxu0 0
    %1642 = vmatpush1.bf16.msra.mxu0 0
    %1643 = vmatprep.subr.bf16.mxu0 0
    %1644 = vmatpush1.bf16.msra.mxu0 0
    %1645 = vmatprep.mubr.bf16.mxu0 0
    %1646 = vmatmul.mubr.bf16.gmra.mrb[0].mxu0 %v1608
    %v1647 = vpop.f32.mrb[0].mxu0
    %v1648 = vadd.f32 0.0, %v1647
    %v1649 = vpop.f32.mrb[0].mxu0
    %v1650 = vpop.f32.mrb[0].mxu0
    %v1651 = vadd.f32 0.0, %v1650
    %v1652 = vpop.f32.mrb[0].mxu0
    %1653 = vdwg.mxu0
    %v1654 = vsel %vm848, %v1648, 0.0
    %v1655 = vsel %vm848, %v1651, 0.0
    %v1656 = vadd.f32 %v1654, %v1040
    %v1657 = vadd.f32 %v1655, %v1041
    %v1658 = vmax.f32 %v1656, 0.0
    %v1659 = vmax.f32 %v1657, 0.0
    %v1660 = vld [vmem:[#allocation5] sm:$0x1]
    %v1661 = vlaneseq
    %v1662 = vshrl.u32 %v1661, 7
    %v1663 = vsub.s32 0, %v1662
    %v1664 = vrot.slane %v1660, %v1663
    %vm1665 = vcmp.eq.s32.totalorder %v743, %v1664
    %v1666 = vsel %vm1665, 1, 0
    %v1667 = vcvt.s32.f32 %v1666
    %v1668 = vpack.c.bf16 %v1667, %v1667
    %v1669 = vpack.c.bf16 %v1659, %v1658
    %v1671 = vsel %vm675, %v1668, 0
    %1673 = vmatprep.subr.bf16.mxu0 0
    %1674 = vmatpush1.bf16.msra.mxu0 %v1669
    %1675 = vmatprep.subr.bf16.mxu0 0
    %1676 = vmatpush1.bf16.msra.mxu0 0
    %1677 = vmatprep.subr.bf16.mxu0 0
    %1678 = vmatpush1.bf16.msra.mxu0 0
    %1679 = vmatprep.subr.bf16.mxu0 0
    %1680 = vmatpush1.bf16.msra.mxu0 0
    %1681 = vmatprep.subr.bf16.mxu0 0
    %1682 = vmatpush1.bf16.msra.mxu0 0
    %1683 = vmatprep.subr.bf16.mxu0 0
    %1684 = vmatpush1.bf16.msra.mxu0 0
    %1685 = vmatprep.subr.bf16.mxu0 0
    %1686 = vmatpush1.bf16.msra.mxu0 0
    %1687 = vmatprep.subr.bf16.mxu0 0
    %1688 = vmatpush1.bf16.msra.mxu0 0
    %1689 = vmatprep.subr.bf16.mxu0 0
    %1690 = vmatpush1.bf16.msra.mxu0 0
    %1691 = vmatprep.subr.bf16.mxu0 0
    %1692 = vmatpush1.bf16.msra.mxu0 0
    %1693 = vmatprep.subr.bf16.mxu0 0
    %1694 = vmatpush1.bf16.msra.mxu0 0
    %1695 = vmatprep.subr.bf16.mxu0 0
    %1696 = vmatpush1.bf16.msra.mxu0 0
    %1697 = vmatprep.subr.bf16.mxu0 0
    %1698 = vmatpush1.bf16.msra.mxu0 0
    %1699 = vmatprep.subr.bf16.mxu0 0
    %1700 = vmatpush1.bf16.msra.mxu0 0
    %1701 = vmatprep.subr.bf16.mxu0 0
    %1702 = vmatpush1.bf16.msra.mxu0 0
    %1703 = vmatprep.subr.bf16.mxu0 0
    %1704 = vmatpush1.bf16.msra.mxu0 0
    %1705 = vmatprep.mubr.bf16.mxu0 0
    %1706 = vmatmul.mubr.bf16.gmra.mrb[0].mxu0 %v1671
    %v1707 = vpop.f32.mrb[0].mxu0
    %v1708 = vadd.f32 0.0, %v1707
    %v1709 = vpop.f32.mrb[0].mxu0
    %v1710 = vpop.f32.mrb[0].mxu0
    %v1711 = vpop.f32.mrb[0].mxu0
    %1712 = vdwg.mxu0
    %v1713 = vpack.c.bf16 %v1708, %v1708
    %v1714 = vld [vmem:[#allocation17] sm:$0xf]
    %v1715 = vld [vmem:[#allocation17 + $0x4] sm:$0xf]
    %v1716 = vld [vmem:[#allocation17 + $0x8] sm:$0xf]
    %v1717 = vld [vmem:[#allocation17 + $0xc] sm:$0xf]
    %v1718 = vld [vmem:[#allocation17 + $0x10] sm:$0xf]
    %v1719 = vld [vmem:[#allocation17 + $0x14] sm:$0xf]
    %v1720 = vld [vmem:[#allocation17 + $0x18] sm:$0xf]
    %v1721 = vld [vmem:[#allocation17 + $0x1c] sm:$0xf]
    %v1722 = vld [vmem:[#allocation17 + $0x20] sm:$0xf]
    %v1723 = vld [vmem:[#allocation17 + $0x24] sm:$0xf]
    %v1724 = vld [vmem:[#allocation17 + $0x28] sm:$0xf]
    %v1725 = vld [vmem:[#allocation17 + $0x2c] sm:$0xf]
    %v1726 = vld [vmem:[#allocation17 + $0x30] sm:$0xf]
    %v1727 = vld [vmem:[#allocation17 + $0x34] sm:$0xf]
    %v1728 = vld [vmem:[#allocation17 + $0x38] sm:$0xf]
    %v1729 = vld [vmem:[#allocation17 + $0x3c] sm:$0xf]
    %v1730 = vld [vmem:[#allocation19] sm:$0x1]
    %v1732 = vlaneseq
    %v1733 = vshrl.u32 %v1732, 7
    %v1734 = vsub.s32 0, %v1733
    %v1735 = vrot.slane %v1730, %v1734
    %v1753 = vunpack.c.l.b16 %v1714
    %v1754 = vunpack.c.l.b16 %v1715
    %v1755 = vunpack.c.l.b16 %v1716
    %v1756 = vunpack.c.l.b16 %v1717
    %v1757 = vunpack.c.l.b16 %v1718
    %v1758 = vunpack.c.l.b16 %v1719
    %v1759 = vunpack.c.l.b16 %v1720
    %v1760 = vunpack.c.l.b16 %v1721
    %v1761 = vunpack.c.l.b16 %v1722
    %v1762 = vunpack.c.l.b16 %v1723
    %v1763 = vunpack.c.l.b16 %v1724
    %v1764 = vunpack.c.l.b16 %v1725
    %v1765 = vunpack.c.l.b16 %v1726
    %v1766 = vunpack.c.l.b16 %v1727
    %v1767 = vunpack.c.l.b16 %v1728
    %v1768 = vunpack.c.l.b16 %v1729
    %v1769 = vpack.c.b16 %v1754, %v1753
    %v1770 = vpack.c.b16 %v1756, %v1755
    %v1771 = vpack.c.b16 %v1758, %v1757
    %v1772 = vpack.c.b16 %v1760, %v1759
    %v1773 = vpack.c.b16 %v1762, %v1761
    %v1774 = vpack.c.b16 %v1764, %v1763
    %v1775 = vpack.c.b16 %v1766, %v1765
    %v1776 = vpack.c.b16 %v1768, %v1767
    %1785 = vmatprep.subr.bf16.mxu0 0
    %1786 = vmatpush1.bf16.msra.mxu0 %v1769
    %1787 = vmatprep.subr.bf16.mxu0 0
    %1788 = vmatpush1.bf16.msra.mxu0 %v1770
    %1789 = vmatprep.subr.bf16.mxu0 0
    %1790 = vmatpush1.bf16.msra.mxu0 %v1771
    %1791 = vmatprep.subr.bf16.mxu0 0
    %1792 = vmatpush1.bf16.msra.mxu0 %v1772
    %1793 = vmatprep.subr.bf16.mxu0 0
    %1794 = vmatpush1.bf16.msra.mxu0 %v1773
    %1795 = vmatprep.subr.bf16.mxu0 0
    %1796 = vmatpush1.bf16.msra.mxu0 %v1774
    %1797 = vmatprep.subr.bf16.mxu0 0
    %1798 = vmatpush1.bf16.msra.mxu0 %v1775
    %1799 = vmatprep.subr.bf16.mxu0 0
    %1800 = vmatpush1.bf16.msra.mxu0 %v1776
    %1801 = vmatprep.subr.bf16.mxu0 0
    %1802 = vmatpush1.bf16.msra.mxu0 0
    %1803 = vmatprep.subr.bf16.mxu0 0
    %1804 = vmatpush1.bf16.msra.mxu0 0
    %1805 = vmatprep.subr.bf16.mxu0 0
    %1806 = vmatpush1.bf16.msra.mxu0 0
    %1807 = vmatprep.subr.bf16.mxu0 0
    %1808 = vmatpush1.bf16.msra.mxu0 0
    %1809 = vmatprep.subr.bf16.mxu0 0
    %1810 = vmatpush1.bf16.msra.mxu0 0
    %1811 = vmatprep.subr.bf16.mxu0 0
    %1812 = vmatpush1.bf16.msra.mxu0 0
    %1813 = vmatprep.subr.bf16.mxu0 0
    %1814 = vmatpush1.bf16.msra.mxu0 0
    %1815 = vmatprep.subr.bf16.mxu0 0
    %1816 = vmatpush1.bf16.msra.mxu0 0
    %1817 = vmatprep.mubr.bf16.mxu0 0
    %1818 = vmatmul.mubr.bf16.gmra.mrb[0].mxu0 %v1713
    %v1819 = vpop.f32.mrb[0].mxu0
    %v1820 = vadd.f32 %v1735, %v1819
    %v1821 = vpop.f32.mrb[0].mxu0
    %v1822 = vpop.f32.mrb[0].mxu0
    %v1823 = vpop.f32.mrb[0].mxu0
    %1824 = vdwg.mxu0
    %v1825 = vmax.f32 %v1820, 0.0
    %v1826 = vpack.c.bf16 %v1825, %v1825
    %v1827 = vld [vmem:[#allocation20] sm:$0xf]
    %v1828 = vld [vmem:[#allocation20 + $0x4] sm:$0xf]
    %v1829 = vld [vmem:[#allocation20 + $0x8] sm:$0xf]
    %v1830 = vld [vmem:[#allocation20 + $0xc] sm:$0xf]
    %v1831 = vld [vmem:[#allocation20 + $0x10] sm:$0xf]
    %v1832 = vld [vmem:[#allocation20 + $0x14] sm:$0xf]
    %v1833 = vld [vmem:[#allocation20 + $0x18] sm:$0xf]
    %v1834 = vld [vmem:[#allocation20 + $0x1c] sm:$0xf]
    %v1835 = vld [vmem:[#allocation20 + $0x20] sm:$0xf]
    %v1836 = vld [vmem:[#allocation20 + $0x24] sm:$0xf]
    %v1837 = vld [vmem:[#allocation20 + $0x28] sm:$0xf]
    %v1838 = vld [vmem:[#allocation20 + $0x2c] sm:$0xf]
    %v1839 = vld [vmem:[#allocation20 + $0x30] sm:$0xf]
    %v1840 = vld [vmem:[#allocation20 + $0x34] sm:$0xf]
    %v1841 = vld [vmem:[#allocation20 + $0x38] sm:$0xf]
    %v1842 = vld [vmem:[#allocation20 + $0x3c] sm:$0xf]
    %v1843 = vld [vmem:[#allocation22] sm:$0x1]
    %v1845 = vlaneseq
    %v1846 = vshrl.u32 %v1845, 7
    %v1847 = vsub.s32 0, %v1846
    %v1848 = vrot.slane %v1843, %v1847
    %v1866 = vunpack.c.l.b16 %v1827
    %v1867 = vunpack.c.l.b16 %v1828
    %v1868 = vunpack.c.l.b16 %v1829
    %v1869 = vunpack.c.l.b16 %v1830
    %v1870 = vunpack.c.l.b16 %v1831
    %v1871 = vunpack.c.l.b16 %v1832
    %v1872 = vunpack.c.l.b16 %v1833
    %v1873 = vunpack.c.l.b16 %v1834
    %v1874 = vunpack.c.l.b16 %v1835
    %v1875 = vunpack.c.l.b16 %v1836
    %v1876 = vunpack.c.l.b16 %v1837
    %v1877 = vunpack.c.l.b16 %v1838
    %v1878 = vunpack.c.l.b16 %v1839
    %v1879 = vunpack.c.l.b16 %v1840
    %v1880 = vunpack.c.l.b16 %v1841
    %v1881 = vunpack.c.l.b16 %v1842
    %v1882 = vpack.c.b16 %v1867, %v1866
    %v1883 = vpack.c.b16 %v1869, %v1868
    %v1884 = vpack.c.b16 %v1871, %v1870
    %v1885 = vpack.c.b16 %v1873, %v1872
    %v1886 = vpack.c.b16 %v1875, %v1874
    %v1887 = vpack.c.b16 %v1877, %v1876
    %v1888 = vpack.c.b16 %v1879, %v1878
    %v1889 = vpack.c.b16 %v1881, %v1880
    %1898 = vmatprep.subr.bf16.mxu0 0
    %1899 = vmatpush1.bf16.msra.mxu0 %v1882
    %1900 = vmatprep.subr.bf16.mxu0 0
    %1901 = vmatpush1.bf16.msra.mxu0 %v1883
    %1902 = vmatprep.subr.bf16.mxu0 0
    %1903 = vmatpush1.bf16.msra.mxu0 %v1884
    %1904 = vmatprep.subr.bf16.mxu0 0
    %1905 = vmatpush1.bf16.msra.mxu0 %v1885
    %1906 = vmatprep.subr.bf16.mxu0 0
    %1907 = vmatpush1.bf16.msra.mxu0 %v1886
    %1908 = vmatprep.subr.bf16.mxu0 0
    %1909 = vmatpush1.bf16.msra.mxu0 %v1887
    %1910 = vmatprep.subr.bf16.mxu0 0
    %1911 = vmatpush1.bf16.msra.mxu0 %v1888
    %1912 = vmatprep.subr.bf16.mxu0 0
    %1913 = vmatpush1.bf16.msra.mxu0 %v1889
    %1914 = vmatprep.subr.bf16.mxu0 0
    %1915 = vmatpush1.bf16.msra.mxu0 0
    %1916 = vmatprep.subr.bf16.mxu0 0
    %1917 = vmatpush1.bf16.msra.mxu0 0
    %1918 = vmatprep.subr.bf16.mxu0 0
    %1919 = vmatpush1.bf16.msra.mxu0 0
    %1920 = vmatprep.subr.bf16.mxu0 0
    %1921 = vmatpush1.bf16.msra.mxu0 0
    %1922 = vmatprep.subr.bf16.mxu0 0
    %1923 = vmatpush1.bf16.msra.mxu0 0
    %1924 = vmatprep.subr.bf16.mxu0 0
    %1925 = vmatpush1.bf16.msra.mxu0 0
    %1926 = vmatprep.subr.bf16.mxu0 0
    %1927 = vmatpush1.bf16.msra.mxu0 0
    %1928 = vmatprep.subr.bf16.mxu0 0
    %1929 = vmatpush1.bf16.msra.mxu0 0
    %1930 = vmatprep.mubr.bf16.mxu0 0
    %1931 = vmatmul.mubr.bf16.gmra.mrb[0].mxu0 %v1826
    %v1932 = vpop.f32.mrb[0].mxu0
    %v1933 = vadd.f32 %v1848, %v1932
    %v1934 = vpop.f32.mrb[0].mxu0
    %v1935 = vpop.f32.mrb[0].mxu0
    %v1936 = vpop.f32.mrb[0].mxu0
    %1937 = vdwg.mxu0
    %1938 = vst [vmem:[#allocation29] sm:$0xff] %v1933
    // Predicated region
    $region138: #{_lambda_.1} parent=1 // pred_check
      _
    $region139: #{_lambda_.1} parent=1 // pred_check_branch
      %1940 = sbr.rel (0) target = $region141
    $region140: #{_lambda_.1} parent=1 // pred_region
      %s1942 = ssub.s32 128, 128
      %1943 = vsyncadd [#allocation4], %s1942
      %s1945 = sshll.u32 [#allocation29], 4
      %s1946 = int_to_ptr.vmem [resolvable:$true] %s1945
      %1948 = dma.vmem_to_hbm [thread:$0]  %s1946, 128, %s17, [#allocation4]
    $region141: #{_lambda_.1} parent=1 // pred_fallthru
      _
    // Predicated region
    $region142: #{_lambda_.1} parent=1 // pred_check
      _
    $region143: #{_lambda_.1} parent=1 // pred_check_branch
      %1950 = sbr.rel (0) target = $region145
    $region144: #{_lambda_.1} parent=1 // pred_region
      %1951 = dma.done [#allocation4], 128
    $region145: #{_lambda_.1} parent=1 // pred_fallthru
      _
    %1952 = vsyncpa [#allocation3], 1
    %1953 = vsyncpa [#allocation6], 1
    %1954 = vsyncpa [#allocation9], 1
    %1955 = vsyncpa [#allocation12], 1
    %1956 = vsyncpa [#allocation15], 1
    %1957 = vsyncpa [#allocation18], 1
    %1958 = vsyncpa [#allocation21], 1
    %1959 = vsyncpa [#allocation24], 1
    %1960 = vsyncpa [#allocation27], 1
    %1961 = vsyncpa [#allocation4], 1

</llo_original>
